<compile_context>
chip_gen: v5e
topology: v5e:2x2
jax: 0.10.0
libtpu: 0.0.40
codegen_flags: <defaults>
</compile_context>

<pallas_src>
import jax
import jax.numpy as jnp
import numpy as np
from jax.experimental import pallas as pl
from jax.experimental.pallas import tpu as pltpu


# --------------------------------------------------------------------------
# Fused kernel: whole network for a block of `nb` images (rows = nb * 8).
# --------------------------------------------------------------------------

def _lenet_kernel(b1e_ref, b1o_ref, w1_ref, b1_ref, w2_ref, b2_ref,
                  wf1_ref, bf1_ref, wf2_ref, bf2_ref, wf3_ref, bf3_ref,
                  o_ref):
    rows = o_ref.shape[0]                      # nb * 8

    def mm(a, b):
        return jnp.dot(a, b, preferred_element_type=jnp.float32)

    def padded(x):
        # Append one zero sublane tile so the shifted slices stay in bounds.
        return jnp.concatenate(
            [x, jnp.zeros((8, x.shape[1]), x.dtype)], axis=0)

    def shift_up(xpad, r):
        # out[i] = x[i + r].  Rows whose (i % 8) + r spills past the image's
        # 8-row tile become garbage; they are never consumed downstream.
        return xpad[r:r + rows, :]

    # ---- conv1 + bias + ReLU fused with the 2x2/2 max-pool -----------------
    # LHS row n*8+m carries the 4 width-shifted input columns for pooled width
    # j1 = 2m (even slab) / 2m+1 (odd slab); the 4 (di, dj) pool phases live in
    # 4 Toeplitz weight variants sharing the same LHS (kw folded into K=112).
    def conv1(lhs):
        z = None
        for di in range(2):
            for dj in range(2):
                zz = mm(lhs, w1_ref[di, dj])
                z = zz if z is None else jnp.maximum(z, zz)
        return jnp.maximum(z + b1_ref[...], 0.0)           # (rows, 78)

    p1e = conv1(b1e_ref[...])     # row n*8+m -> pool1[n, :, :, j1 = 2m]
    p1o = conv1(b1o_ref[...])     # row n*8+m -> pool1[n, :, :, j1 = 2m + 1]
    p1e_pad = padded(p1e)
    p1o_pad = padded(p1o)

    # ---- conv2 + bias + ReLU fused with the 2x2/2 max-pool -----------------
    # Tap c = dj + kw needs pool1 width j1 = 2*j2p + c:
    #   c even -> even slab shifted by c//2 rows, c odd -> odd slab by c//2.
    taps = (p1e, p1o, shift_up(p1e_pad, 1), shift_up(p1o_pad, 1))
    z2 = None
    for di in range(2):
        for dj in range(2):
            acc = mm(taps[dj + 0], w2_ref[di, 0])
            acc = acc + mm(taps[dj + 1], w2_ref[di, 1])
            acc = acc + mm(taps[dj + 2], w2_ref[di, 2])
            z2 = acc if z2 is None else jnp.maximum(z2, acc)
    # (rows, 80): row n*8 + j2p, col i2p*16 + c2
    p2 = jnp.maximum(z2 + b2_ref[...], 0.0)
    p2_pad = padded(p2)

    # ---- FC head: valid results live in row n*8 + 0 of each image tile -----
    # fc1's PyTorch (C,H,W) flatten order is folded into wf1's row order.
    h = mm(p2, wf1_ref[0])
    for r in range(1, 5):
        h = h + mm(shift_up(p2_pad, r), wf1_ref[r])
    h = jnp.maximum(h + bf1_ref[...], 0.0)                       # (rows, 120)
    h = jnp.maximum(mm(h, wf2_ref[...]) + bf2_ref[...], 0.0)     # (rows, 84)
    logits = mm(h, wf3_ref[...]) + bf3_ref[...]                  # (rows, 10)

    # log_softmax over dim=1, one block-wide store.
    shifted = logits - jnp.max(logits, axis=-1, keepdims=True)
    lse = jnp.log(jnp.sum(jnp.exp(shifted), axis=-1, keepdims=True))
    o_ref[...] = shifted - lse


# --------------------------------------------------------------------------
# One-time parameter / input re-packing (wrapper-side XLA ops).
# --------------------------------------------------------------------------

def _round_up(a, b):
    return (a + b - 1) // b * b


def _build_conv1_w(w1, b1):
    # W[di, dj, c*28+h, h1*6+c1] = w1[c1, 0, h-(2*h1+di), c-dj] if valid else 0
    di = jnp.arange(2).reshape(2, 1, 1, 1, 1, 1)
    dj = jnp.arange(2).reshape(1, 2, 1, 1, 1, 1)
    c = jnp.arange(4).reshape(1, 1, 4, 1, 1, 1)
    h = jnp.arange(28).reshape(1, 1, 1, 28, 1, 1)
    h1 = jnp.arange(13).reshape(1, 1, 1, 1, 13, 1)
    c1 = jnp.arange(6).reshape(1, 1, 1, 1, 1, 6)
    kh = h - (2 * h1 + di)
    kw = c - dj
    valid = (kh >= 0) & (kh <= 2) & (kw >= 0) & (kw <= 2)
    vals = w1[c1, 0, jnp.clip(kh, 0, 2), jnp.clip(kw, 0, 2)]
    W = jnp.where(valid, vals, 0.0).astype(jnp.float32).reshape(2, 2, 112, 78)
    bt = jnp.tile(b1, 13).reshape(1, 78).astype(jnp.float32)
    return W, bt


def _build_conv2_w(w2, b2):
    # W[di, kw, h1*6+c1, i2p*16+c2] = w2[c2, c1, h1-(2*i2p+di), kw] if valid.
    di = jnp.arange(2).reshape(2, 1, 1, 1, 1, 1)
    kw = jnp.arange(3).reshape(1, 3, 1, 1, 1, 1)
    h1 = jnp.arange(13).reshape(1, 1, 13, 1, 1, 1)
    c1 = jnp.arange(6).reshape(1, 1, 1, 6, 1, 1)
    i2 = jnp.arange(5).reshape(1, 1, 1, 1, 5, 1)
    c2 = jnp.arange(16).reshape(1, 1, 1, 1, 1, 16)
    kh = h1 - (2 * i2 + di)
    valid = (kh >= 0) & (kh <= 2)
    vals = w2[c2, c1, jnp.clip(kh, 0, 2), kw]
    W = jnp.where(valid, vals, 0.0).astype(jnp.float32).reshape(2, 3, 78, 80)
    bt = jnp.tile(b2, 5).reshape(1, 80).astype(jnp.float32)
    return W, bt


def _build_fc1_w(fc1_w):
    # Rows reordered so the kernel's (j2p, i2p*16+c2) activation layout feeds
    # fc1 directly (absorbs PyTorch's x.view(-1, 5*5*16) flatten order).
    return (fc1_w.T.reshape(16, 5, 5, 120)
            .transpose(2, 1, 0, 3)
            .reshape(5, 80, 120).astype(jnp.float32))


def _build_conv1_lhs(xw, parity, n_valid):
    # xw[n, j, h] = image[n, h, j].  Returns (N*8, 112) with
    # row n*8 + m, col c*28 + h  =  image[n, h, 4m + 2*parity + c]  (0 if pad).
    m = np.arange(8)
    c = np.arange(4)
    j = 4 * m[:, None] + 2 * parity + c[None, :]            # (8, 4)
    valid = (m[:, None] < n_valid) & (j <= 27)
    slab = xw[:, np.clip(j, 0, 27), :]                       # (N, 8, 4, 28)
    slab = jnp.where(jnp.asarray(valid)[None, :, :, None], slab, 0.0)
    return slab.reshape(-1, 112)


# --------------------------------------------------------------------------
# pallas_call wrapper
# --------------------------------------------------------------------------

def convolutional_network_forward(x_nchw, params):
    n = x_nchw.shape[0]
    assert x_nchw.shape[1:] == (1, 28, 28), x_nchw.shape

    # Block size: every image owns one 8-row sublane tile.  >= 2 grid steps for
    # larger batches (v7x megacore), <= 256 images per block (VMEM / MXU M).
    n8 = _round_up(n, 8)
    if n8 <= 16:
        num_blocks, nb = 1, n8
    else:
        num_blocks = max(2, -(-n8 // 256))
        nb = _round_up(-(-n8 // num_blocks), 8)
    n_pad = num_blocks * nb

    # Pad ragged batches (no full-batch unrolling), build the two conv1 LHS
    # width-parity slabs.  TODO(synk): fold this gather into the kernel if the
    # wrapper pre-pass ever shows up on the HBM roofline at very large batch.
    x = x_nchw[:, 0, :, :].astype(jnp.float32)
    if n_pad != n:
        x = jnp.concatenate(
            [x, jnp.zeros((n_pad - n, 28, 28), jnp.float32)], axis=0)
    xw = jnp.transpose(x, (0, 2, 1))            # xw[n, j, h] = x[n, 0, h, j]
    b1e = _build_conv1_lhs(xw, 0, 7)            # pooled widths j1 = 0,2,...,12
    b1o = _build_conv1_lhs(xw, 1, 6)            # pooled widths j1 = 1,3,...,11

    W1, b1t = _build_conv1_w(params["conv1_w"], params["conv1_b"])
    W2, b2t = _build_conv2_w(params["conv2_w"], params["conv2_b"])
    Wf1 = _build_fc1_w(params["fc1_w"])
    bf1 = params["fc1_b"].reshape(1, 120).astype(jnp.float32)
    Wf2 = params["fc2_w"].T.astype(jnp.float32)            # (120, 84)
    bf2 = params["fc2_b"].reshape(1, 84).astype(jnp.float32)
    Wf3 = params["fc3_w"].T.astype(jnp.float32)             # (84, 10)
    bf3 = params["fc3_b"].reshape(1, 10).astype(jnp.float32)

    args = (b1e, b1o, W1, b1t, W2, b2t, Wf1, bf1, Wf2, bf2, Wf3, bf3)

    def _const_spec(a):
        nd = a.ndim

        def imap(i):
            return (0,) * nd

        return pl.BlockSpec(a.shape, imap)

    in_specs = [
        pl.BlockSpec((nb * 8, 112), lambda i: (i, 0)),
        pl.BlockSpec((nb * 8, 112), lambda i: (i, 0)),
    ] + [_const_spec(a) for a in args[2:]]

    out = pl.pallas_call(
        _lenet_kernel,
        out_shape=jax.ShapeDtypeStruct((n_pad * 8, 10), jnp.float32),
        grid=(num_blocks,),
        in_specs=in_specs,
        out_specs=pl.BlockSpec((nb * 8, 10), lambda i: (i, 0)),
        compiler_params=pltpu.CompilerParams(
            dimension_semantics=("parallel",),
            vmem_limit_bytes=64 * 1024 * 1024),
    )(*args)

    # Row 8*i of the padded output holds image i's log-probabilities.
    return out[0:n * 8:8]


# --------------------------------------------------------------------------
# Pure-JAX reference (mirrors the PyTorch module)
# --------------------------------------------------------------------------

def reference_forward(x_nchw, params):
    x = jnp.transpose(x_nchw, (0, 2, 3, 1))

    def conv(x, w_oihw, b):
        w = jnp.transpose(w_oihw, (2, 3, 1, 0))  # HWIO
        y = jax.lax.conv_general_dilated(
            x, w, (1, 1), "VALID", dimension_numbers=("NHWC", "HWIO", "NHWC"))
        return jax.nn.relu(y + b)

    def pool(x):
        return jax.lax.reduce_window(x, -jnp.inf, jax.lax.max,
                                     (1, 2, 2, 1), (1, 2, 2, 1), "VALID")

    y = pool(conv(x, params["conv1_w"], params["conv1_b"]))
    y = pool(conv(y, params["conv2_w"], params["conv2_b"]))
    flat = jnp.transpose(y, (0, 3, 1, 2)).reshape(y.shape[0], -1)
    h = jax.nn.relu(flat @ params["fc1_w"].T + params["fc1_b"])
    h = jax.nn.relu(h @ params["fc2_w"].T + params["fc2_b"])
    logits = h @ params["fc3_w"].T + params["fc3_b"]
    return jax.nn.log_softmax(logits, axis=1)


# --------------------------------------------------------------------------
# main
# --------------------------------------------------------------------------

def _uniform(key, shape, fan_in):
    bound = 1.0 / (fan_in ** 0.5)
    return jax.random.uniform(key, shape, jnp.float32, -bound, bound)


if __name__ == "__main__":
    key = jax.random.PRNGKey(0)
    ks = jax.random.split(key, 12)

    params = {
        "conv1_w": _uniform(ks[0], (6, 1, 3, 3), 9),
        "conv1_b": _uniform(ks[1], (6,), 9),
        "conv2_w": _uniform(ks[2], (16, 6, 3, 3), 54),
        "conv2_b": _uniform(ks[3], (16,), 54),
        "fc1_w": _uniform(ks[4], (120, 400), 400),
        "fc1_b": _uniform(ks[5], (120,), 400),
        "fc2_w": _uniform(ks[6], (84, 120), 120),
        "fc2_b": _uniform(ks[7], (84,), 120),
        "fc3_w": _uniform(ks[8], (10, 84), 84),
        "fc3_b": _uniform(ks[9], (10,), 84),
    }

    fwd = jax.jit(convolutional_network_forward)

    # MNIST-style input: batch=2, 1 channel, 28x28 (fc1 expects 5*5*16 -> 120)
    x = jax.random.normal(ks[10], (2, 1, 28, 28), jnp.float32)
    out = jax.block_until_ready(fwd(x, params))
    ref = jax.block_until_ready(reference_forward(x, params))
    assert out.shape == (2, 10), out.shape
    max_diff = jnp.max(jnp.abs(out - ref))
    assert jnp.allclose(out, ref, atol=2e-4, rtol=2e-4), (
        f"max abs diff = {max_diff}")

    # Ragged, multi-block batch exercises the padding + 2-step grid path.
    x2 = jax.random.normal(ks[11], (20, 1, 28, 28), jnp.float32)
    out2 = jax.block_until_ready(fwd(x2, params))
    ref2 = jax.block_until_ready(reference_forward(x2, params))
    assert out2.shape == (20, 10), out2.shape
    max_diff2 = jnp.max(jnp.abs(out2 - ref2))
    assert jnp.allclose(out2, ref2, atol=2e-4, rtol=2e-4), (
        f"max abs diff = {max_diff2}")

    print("KERNEL_OK")
</pallas_src>

<mosaic_0001>
module attributes {stable_mosaic.version = 11 : i64} {
  func.func @_lenet_kernel(%arg0: i32, %arg1: memref<64x112xf32, #tpu.memory_space<vmem>>, %arg2: memref<64x112xf32, #tpu.memory_space<vmem>>, %arg3: memref<2x2x112x78xf32, #tpu.memory_space<vmem>>, %arg4: memref<1x78xf32, #tpu.memory_space<vmem>>, %arg5: memref<2x3x78x80xf32, #tpu.memory_space<vmem>>, %arg6: memref<1x80xf32, #tpu.memory_space<vmem>>, %arg7: memref<5x80x120xf32, #tpu.memory_space<vmem>>, %arg8: memref<1x120xf32, #tpu.memory_space<vmem>>, %arg9: memref<120x84xf32, #tpu.memory_space<vmem>>, %arg10: memref<1x84xf32, #tpu.memory_space<vmem>>, %arg11: memref<84x10xf32, #tpu.memory_space<vmem>>, %arg12: memref<1x10xf32, #tpu.memory_space<vmem>>, %arg13: memref<64x10xf32, #tpu.memory_space<vmem>>) attributes {dimension_semantics = [#tpu.dimension_semantics<parallel>], iteration_bounds = array<i64: 1>, scalar_prefetch = 0 : i64, scratch_operands = 0 : i64, tpu.core_type = #tpu.core_type<tc>, window_params = [{transform_indices = @transform_0, window_bounds = array<i64: 64, 112>}, {transform_indices = @transform_1, window_bounds = array<i64: 64, 112>}, {pipeline_mode = #tpu.pipeline_mode<synchronous>, transform_indices = @transform_2, window_bounds = array<i64: 2, 2, 112, 78>}, {pipeline_mode = #tpu.pipeline_mode<synchronous>, transform_indices = @transform_3, window_bounds = array<i64: 1, 78>}, {pipeline_mode = #tpu.pipeline_mode<synchronous>, transform_indices = @transform_4, window_bounds = array<i64: 2, 3, 78, 80>}, {pipeline_mode = #tpu.pipeline_mode<synchronous>, transform_indices = @transform_5, window_bounds = array<i64: 1, 80>}, {pipeline_mode = #tpu.pipeline_mode<synchronous>, transform_indices = @transform_6, window_bounds = array<i64: 5, 80, 120>}, {pipeline_mode = #tpu.pipeline_mode<synchronous>, transform_indices = @transform_7, window_bounds = array<i64: 1, 120>}, {pipeline_mode = #tpu.pipeline_mode<synchronous>, transform_indices = @transform_8, window_bounds = array<i64: 120, 84>}, {pipeline_mode = #tpu.pipeline_mode<synchronous>, transform_indices = @transform_9, window_bounds = array<i64: 1, 84>}, {pipeline_mode = #tpu.pipeline_mode<synchronous>, transform_indices = @transform_10, window_bounds = array<i64: 84, 10>}, {pipeline_mode = #tpu.pipeline_mode<synchronous>, transform_indices = @transform_11, window_bounds = array<i64: 1, 10>}, {transform_indices = @transform_12, window_bounds = array<i64: 64, 10>}]} {
    %c0 = arith.constant 0 : index
    %c0_0 = arith.constant 0 : index
    %0 = vector.load %arg1[%c0, %c0_0] : memref<64x112xf32, #tpu.memory_space<vmem>>, vector<64x112xf32>
    %c0_1 = arith.constant 0 : index
    %c0_2 = arith.constant 0 : index
    %c0_3 = arith.constant 0 : index
    %c0_4 = arith.constant 0 : index
    %1 = vector.load %arg3[%c0_1, %c0_2, %c0_3, %c0_4] : memref<2x2x112x78xf32, #tpu.memory_space<vmem>>, vector<1x1x112x78xf32>
    %2 = vector.shape_cast %1 : vector<1x1x112x78xf32> to vector<112x78xf32>
    %cst = arith.constant dense<0.000000e+00> : vector<64x78xf32>
    %3 = tpu.matmul %0, %2, %cst {dimension_numbers = #tpu.dot_dimension_numbers<[1], [0], [0], [1], [0, 0, 1, 1], [], []>} : vector<64x112xf32>, vector<112x78xf32>, vector<64x78xf32> -> vector<64x78xf32>
    %c0_5 = arith.constant 0 : index
    %c1 = arith.constant 1 : index
    %c0_6 = arith.constant 0 : index
    %c0_7 = arith.constant 0 : index
    %4 = vector.load %arg3[%c0_5, %c1, %c0_6, %c0_7] : memref<2x2x112x78xf32, #tpu.memory_space<vmem>>, vector<1x1x112x78xf32>
    %5 = vector.shape_cast %4 : vector<1x1x112x78xf32> to vector<112x78xf32>
    %cst_8 = arith.constant dense<0.000000e+00> : vector<64x78xf32>
    %6 = tpu.matmul %0, %5, %cst_8 {dimension_numbers = #tpu.dot_dimension_numbers<[1], [0], [0], [1], [0, 0, 1, 1], [], []>} : vector<64x112xf32>, vector<112x78xf32>, vector<64x78xf32> -> vector<64x78xf32>
    %7 = arith.maximumf %3, %6 : vector<64x78xf32>
    %c1_9 = arith.constant 1 : index
    %c0_10 = arith.constant 0 : index
    %c0_11 = arith.constant 0 : index
    %c0_12 = arith.constant 0 : index
    %8 = vector.load %arg3[%c1_9, %c0_10, %c0_11, %c0_12] : memref<2x2x112x78xf32, #tpu.memory_space<vmem>>, vector<1x1x112x78xf32>
    %9 = vector.shape_cast %8 : vector<1x1x112x78xf32> to vector<112x78xf32>
    %cst_13 = arith.constant dense<0.000000e+00> : vector<64x78xf32>
    %10 = tpu.matmul %0, %9, %cst_13 {dimension_numbers = #tpu.dot_dimension_numbers<[1], [0], [0], [1], [0, 0, 1, 1], [], []>} : vector<64x112xf32>, vector<112x78xf32>, vector<64x78xf32> -> vector<64x78xf32>
    %11 = arith.maximumf %7, %10 : vector<64x78xf32>
    %c1_14 = arith.constant 1 : index
    %c1_15 = arith.constant 1 : index
    %c0_16 = arith.constant 0 : index
    %c0_17 = arith.constant 0 : index
    %12 = vector.load %arg3[%c1_14, %c1_15, %c0_16, %c0_17] : memref<2x2x112x78xf32, #tpu.memory_space<vmem>>, vector<1x1x112x78xf32>
    %13 = vector.shape_cast %12 : vector<1x1x112x78xf32> to vector<112x78xf32>
    %cst_18 = arith.constant dense<0.000000e+00> : vector<64x78xf32>
    %14 = tpu.matmul %0, %13, %cst_18 {dimension_numbers = #tpu.dot_dimension_numbers<[1], [0], [0], [1], [0, 0, 1, 1], [], []>} : vector<64x112xf32>, vector<112x78xf32>, vector<64x78xf32> -> vector<64x78xf32>
    %15 = arith.maximumf %11, %14 : vector<64x78xf32>
    %c0_19 = arith.constant 0 : index
    %c0_20 = arith.constant 0 : index
    %16 = vector.load %arg4[%c0_19, %c0_20] : memref<1x78xf32, #tpu.memory_space<vmem>>, vector<1x78xf32>
    %17 = vector.broadcast %16 : vector<1x78xf32> to vector<64x78xf32>
    %18 = arith.addf %15, %17 : vector<64x78xf32>
    %cst_21 = arith.constant 0.000000e+00 : f32
    %19 = vector.broadcast %cst_21 : f32 to vector<64x78xf32>
    %20 = arith.maximumf %18, %19 : vector<64x78xf32>
    %c0_22 = arith.constant 0 : index
    %c0_23 = arith.constant 0 : index
    %21 = vector.load %arg2[%c0_22, %c0_23] : memref<64x112xf32, #tpu.memory_space<vmem>>, vector<64x112xf32>
    %c0_24 = arith.constant 0 : index
    %c0_25 = arith.constant 0 : index
    %c0_26 = arith.constant 0 : index
    %c0_27 = arith.constant 0 : index
    %22 = vector.load %arg3[%c0_24, %c0_25, %c0_26, %c0_27] : memref<2x2x112x78xf32, #tpu.memory_space<vmem>>, vector<1x1x112x78xf32>
    %23 = vector.shape_cast %22 : vector<1x1x112x78xf32> to vector<112x78xf32>
    %cst_28 = arith.constant dense<0.000000e+00> : vector<64x78xf32>
    %24 = tpu.matmul %21, %23, %cst_28 {dimension_numbers = #tpu.dot_dimension_numbers<[1], [0], [0], [1], [0, 0, 1, 1], [], []>} : vector<64x112xf32>, vector<112x78xf32>, vector<64x78xf32> -> vector<64x78xf32>
    %c0_29 = arith.constant 0 : index
    %c1_30 = arith.constant 1 : index
    %c0_31 = arith.constant 0 : index
    %c0_32 = arith.constant 0 : index
    %25 = vector.load %arg3[%c0_29, %c1_30, %c0_31, %c0_32] : memref<2x2x112x78xf32, #tpu.memory_space<vmem>>, vector<1x1x112x78xf32>
    %26 = vector.shape_cast %25 : vector<1x1x112x78xf32> to vector<112x78xf32>
    %cst_33 = arith.constant dense<0.000000e+00> : vector<64x78xf32>
    %27 = tpu.matmul %21, %26, %cst_33 {dimension_numbers = #tpu.dot_dimension_numbers<[1], [0], [0], [1], [0, 0, 1, 1], [], []>} : vector<64x112xf32>, vector<112x78xf32>, vector<64x78xf32> -> vector<64x78xf32>
    %28 = arith.maximumf %24, %27 : vector<64x78xf32>
    %c1_34 = arith.constant 1 : index
    %c0_35 = arith.constant 0 : index
    %c0_36 = arith.constant 0 : index
    %c0_37 = arith.constant 0 : index
    %29 = vector.load %arg3[%c1_34, %c0_35, %c0_36, %c0_37] : memref<2x2x112x78xf32, #tpu.memory_space<vmem>>, vector<1x1x112x78xf32>
    %30 = vector.shape_cast %29 : vector<1x1x112x78xf32> to vector<112x78xf32>
    %cst_38 = arith.constant dense<0.000000e+00> : vector<64x78xf32>
    %31 = tpu.matmul %21, %30, %cst_38 {dimension_numbers = #tpu.dot_dimension_numbers<[1], [0], [0], [1], [0, 0, 1, 1], [], []>} : vector<64x112xf32>, vector<112x78xf32>, vector<64x78xf32> -> vector<64x78xf32>
    %32 = arith.maximumf %28, %31 : vector<64x78xf32>
    %c1_39 = arith.constant 1 : index
    %c1_40 = arith.constant 1 : index
    %c0_41 = arith.constant 0 : index
    %c0_42 = arith.constant 0 : index
    %33 = vector.load %arg3[%c1_39, %c1_40, %c0_41, %c0_42] : memref<2x2x112x78xf32, #tpu.memory_space<vmem>>, vector<1x1x112x78xf32>
    %34 = vector.shape_cast %33 : vector<1x1x112x78xf32> to vector<112x78xf32>
    %cst_43 = arith.constant dense<0.000000e+00> : vector<64x78xf32>
    %35 = tpu.matmul %21, %34, %cst_43 {dimension_numbers = #tpu.dot_dimension_numbers<[1], [0], [0], [1], [0, 0, 1, 1], [], []>} : vector<64x112xf32>, vector<112x78xf32>, vector<64x78xf32> -> vector<64x78xf32>
    %36 = arith.maximumf %32, %35 : vector<64x78xf32>
    %c0_44 = arith.constant 0 : index
    %c0_45 = arith.constant 0 : index
    %37 = vector.load %arg4[%c0_44, %c0_45] : memref<1x78xf32, #tpu.memory_space<vmem>>, vector<1x78xf32>
    %38 = vector.broadcast %37 : vector<1x78xf32> to vector<64x78xf32>
    %39 = arith.addf %36, %38 : vector<64x78xf32>
    %cst_46 = arith.constant 0.000000e+00 : f32
    %40 = vector.broadcast %cst_46 : f32 to vector<64x78xf32>
    %41 = arith.maximumf %39, %40 : vector<64x78xf32>
    %cst_47 = arith.constant 0.000000e+00 : f32
    %42 = vector.broadcast %cst_47 : f32 to vector<8x78xf32>
    %43 = tpu.concatenate %20, %42 in 0 : vector<64x78xf32>, vector<8x78xf32> -> vector<72x78xf32>
    %cst_48 = arith.constant 0.000000e+00 : f32
    %44 = vector.broadcast %cst_48 : f32 to vector<8x78xf32>
    %45 = tpu.concatenate %41, %44 in 0 : vector<64x78xf32>, vector<8x78xf32> -> vector<72x78xf32>
    %46 = vector.extract_strided_slice %43 {offsets = [1, 0], sizes = [64, 78], strides = [1, 1]} : vector<72x78xf32> to vector<64x78xf32>
    %47 = vector.extract_strided_slice %45 {offsets = [1, 0], sizes = [64, 78], strides = [1, 1]} : vector<72x78xf32> to vector<64x78xf32>
    %c0_49 = arith.constant 0 : index
    %c0_50 = arith.constant 0 : index
    %c0_51 = arith.constant 0 : index
    %c0_52 = arith.constant 0 : index
    %48 = vector.load %arg5[%c0_49, %c0_50, %c0_51, %c0_52] : memref<2x3x78x80xf32, #tpu.memory_space<vmem>>, vector<1x1x78x80xf32>
    %49 = vector.shape_cast %48 : vector<1x1x78x80xf32> to vector<78x80xf32>
    %cst_53 = arith.constant dense<0.000000e+00> : vector<64x80xf32>
    %50 = tpu.matmul %20, %49, %cst_53 {dimension_numbers = #tpu.dot_dimension_numbers<[1], [0], [0], [1], [0, 0, 1, 1], [], []>} : vector<64x78xf32>, vector<78x80xf32>, vector<64x80xf32> -> vector<64x80xf32>
    %c0_54 = arith.constant 0 : index
    %c1_55 = arith.constant 1 : index
    %c0_56 = arith.constant 0 : index
    %c0_57 = arith.constant 0 : index
    %51 = vector.load %arg5[%c0_54, %c1_55, %c0_56, %c0_57] : memref<2x3x78x80xf32, #tpu.memory_space<vmem>>, vector<1x1x78x80xf32>
    %52 = vector.shape_cast %51 : vector<1x1x78x80xf32> to vector<78x80xf32>
    %cst_58 = arith.constant dense<0.000000e+00> : vector<64x80xf32>
    %53 = tpu.matmul %41, %52, %cst_58 {dimension_numbers = #tpu.dot_dimension_numbers<[1], [0], [0], [1], [0, 0, 1, 1], [], []>} : vector<64x78xf32>, vector<78x80xf32>, vector<64x80xf32> -> vector<64x80xf32>
    %54 = arith.addf %50, %53 : vector<64x80xf32>
    %c0_59 = arith.constant 0 : index
    %c2 = arith.constant 2 : index
    %c0_60 = arith.constant 0 : index
    %c0_61 = arith.constant 0 : index
    %55 = vector.load %arg5[%c0_59, %c2, %c0_60, %c0_61] : memref<2x3x78x80xf32, #tpu.memory_space<vmem>>, vector<1x1x78x80xf32>
    %56 = vector.shape_cast %55 : vector<1x1x78x80xf32> to vector<78x80xf32>
    %cst_62 = arith.constant dense<0.000000e+00> : vector<64x80xf32>
    %57 = tpu.matmul %46, %56, %cst_62 {dimension_numbers = #tpu.dot_dimension_numbers<[1], [0], [0], [1], [0, 0, 1, 1], [], []>} : vector<64x78xf32>, vector<78x80xf32>, vector<64x80xf32> -> vector<64x80xf32>
    %58 = arith.addf %54, %57 : vector<64x80xf32>
    %c0_63 = arith.constant 0 : index
    %c0_64 = arith.constant 0 : index
    %c0_65 = arith.constant 0 : index
    %c0_66 = arith.constant 0 : index
    %59 = vector.load %arg5[%c0_63, %c0_64, %c0_65, %c0_66] : memref<2x3x78x80xf32, #tpu.memory_space<vmem>>, vector<1x1x78x80xf32>
    %60 = vector.shape_cast %59 : vector<1x1x78x80xf32> to vector<78x80xf32>
    %cst_67 = arith.constant dense<0.000000e+00> : vector<64x80xf32>
    %61 = tpu.matmul %41, %60, %cst_67 {dimension_numbers = #tpu.dot_dimension_numbers<[1], [0], [0], [1], [0, 0, 1, 1], [], []>} : vector<64x78xf32>, vector<78x80xf32>, vector<64x80xf32> -> vector<64x80xf32>
    %c0_68 = arith.constant 0 : index
    %c1_69 = arith.constant 1 : index
    %c0_70 = arith.constant 0 : index
    %c0_71 = arith.constant 0 : index
    %62 = vector.load %arg5[%c0_68, %c1_69, %c0_70, %c0_71] : memref<2x3x78x80xf32, #tpu.memory_space<vmem>>, vector<1x1x78x80xf32>
    %63 = vector.shape_cast %62 : vector<1x1x78x80xf32> to vector<78x80xf32>
    %cst_72 = arith.constant dense<0.000000e+00> : vector<64x80xf32>
    %64 = tpu.matmul %46, %63, %cst_72 {dimension_numbers = #tpu.dot_dimension_numbers<[1], [0], [0], [1], [0, 0, 1, 1], [], []>} : vector<64x78xf32>, vector<78x80xf32>, vector<64x80xf32> -> vector<64x80xf32>
    %65 = arith.addf %61, %64 : vector<64x80xf32>
    %c0_73 = arith.constant 0 : index
    %c2_74 = arith.constant 2 : index
    %c0_75 = arith.constant 0 : index
    %c0_76 = arith.constant 0 : index
    %66 = vector.load %arg5[%c0_73, %c2_74, %c0_75, %c0_76] : memref<2x3x78x80xf32, #tpu.memory_space<vmem>>, vector<1x1x78x80xf32>
    %67 = vector.shape_cast %66 : vector<1x1x78x80xf32> to vector<78x80xf32>
    %cst_77 = arith.constant dense<0.000000e+00> : vector<64x80xf32>
    %68 = tpu.matmul %47, %67, %cst_77 {dimension_numbers = #tpu.dot_dimension_numbers<[1], [0], [0], [1], [0, 0, 1, 1], [], []>} : vector<64x78xf32>, vector<78x80xf32>, vector<64x80xf32> -> vector<64x80xf32>
    %69 = arith.addf %65, %68 : vector<64x80xf32>
    %70 = arith.maximumf %58, %69 : vector<64x80xf32>
    %c1_78 = arith.constant 1 : index
    %c0_79 = arith.constant 0 : index
    %c0_80 = arith.constant 0 : index
    %c0_81 = arith.constant 0 : index
    %71 = vector.load %arg5[%c1_78, %c0_79, %c0_80, %c0_81] : memref<2x3x78x80xf32, #tpu.memory_space<vmem>>, vector<1x1x78x80xf32>
    %72 = vector.shape_cast %71 : vector<1x1x78x80xf32> to vector<78x80xf32>
    %cst_82 = arith.constant dense<0.000000e+00> : vector<64x80xf32>
    %73 = tpu.matmul %20, %72, %cst_82 {dimension_numbers = #tpu.dot_dimension_numbers<[1], [0], [0], [1], [0, 0, 1, 1], [], []>} : vector<64x78xf32>, vector<78x80xf32>, vector<64x80xf32> -> vector<64x80xf32>
    %c1_83 = arith.constant 1 : index
    %c1_84 = arith.constant 1 : index
    %c0_85 = arith.constant 0 : index
    %c0_86 = arith.constant 0 : index
    %74 = vector.load %arg5[%c1_83, %c1_84, %c0_85, %c0_86] : memref<2x3x78x80xf32, #tpu.memory_space<vmem>>, vector<1x1x78x80xf32>
    %75 = vector.shape_cast %74 : vector<1x1x78x80xf32> to vector<78x80xf32>
    %cst_87 = arith.constant dense<0.000000e+00> : vector<64x80xf32>
    %76 = tpu.matmul %41, %75, %cst_87 {dimension_numbers = #tpu.dot_dimension_numbers<[1], [0], [0], [1], [0, 0, 1, 1], [], []>} : vector<64x78xf32>, vector<78x80xf32>, vector<64x80xf32> -> vector<64x80xf32>
    %77 = arith.addf %73, %76 : vector<64x80xf32>
    %c1_88 = arith.constant 1 : index
    %c2_89 = arith.constant 2 : index
    %c0_90 = arith.constant 0 : index
    %c0_91 = arith.constant 0 : index
    %78 = vector.load %arg5[%c1_88, %c2_89, %c0_90, %c0_91] : memref<2x3x78x80xf32, #tpu.memory_space<vmem>>, vector<1x1x78x80xf32>
    %79 = vector.shape_cast %78 : vector<1x1x78x80xf32> to vector<78x80xf32>
    %cst_92 = arith.constant dense<0.000000e+00> : vector<64x80xf32>
    %80 = tpu.matmul %46, %79, %cst_92 {dimension_numbers = #tpu.dot_dimension_numbers<[1], [0], [0], [1], [0, 0, 1, 1], [], []>} : vector<64x78xf32>, vector<78x80xf32>, vector<64x80xf32> -> vector<64x80xf32>
    %81 = arith.addf %77, %80 : vector<64x80xf32>
    %82 = arith.maximumf %70, %81 : vector<64x80xf32>
    %c1_93 = arith.constant 1 : index
    %c0_94 = arith.constant 0 : index
    %c0_95 = arith.constant 0 : index
    %c0_96 = arith.constant 0 : index
    %83 = vector.load %arg5[%c1_93, %c0_94, %c0_95, %c0_96] : memref<2x3x78x80xf32, #tpu.memory_space<vmem>>, vector<1x1x78x80xf32>
    %84 = vector.shape_cast %83 : vector<1x1x78x80xf32> to vector<78x80xf32>
    %cst_97 = arith.constant dense<0.000000e+00> : vector<64x80xf32>
    %85 = tpu.matmul %41, %84, %cst_97 {dimension_numbers = #tpu.dot_dimension_numbers<[1], [0], [0], [1], [0, 0, 1, 1], [], []>} : vector<64x78xf32>, vector<78x80xf32>, vector<64x80xf32> -> vector<64x80xf32>
    %c1_98 = arith.constant 1 : index
    %c1_99 = arith.constant 1 : index
    %c0_100 = arith.constant 0 : index
    %c0_101 = arith.constant 0 : index
    %86 = vector.load %arg5[%c1_98, %c1_99, %c0_100, %c0_101] : memref<2x3x78x80xf32, #tpu.memory_space<vmem>>, vector<1x1x78x80xf32>
    %87 = vector.shape_cast %86 : vector<1x1x78x80xf32> to vector<78x80xf32>
    %cst_102 = arith.constant dense<0.000000e+00> : vector<64x80xf32>
    %88 = tpu.matmul %46, %87, %cst_102 {dimension_numbers = #tpu.dot_dimension_numbers<[1], [0], [0], [1], [0, 0, 1, 1], [], []>} : vector<64x78xf32>, vector<78x80xf32>, vector<64x80xf32> -> vector<64x80xf32>
    %89 = arith.addf %85, %88 : vector<64x80xf32>
    %c1_103 = arith.constant 1 : index
    %c2_104 = arith.constant 2 : index
    %c0_105 = arith.constant 0 : index
    %c0_106 = arith.constant 0 : index
    %90 = vector.load %arg5[%c1_103, %c2_104, %c0_105, %c0_106] : memref<2x3x78x80xf32, #tpu.memory_space<vmem>>, vector<1x1x78x80xf32>
    %91 = vector.shape_cast %90 : vector<1x1x78x80xf32> to vector<78x80xf32>
    %cst_107 = arith.constant dense<0.000000e+00> : vector<64x80xf32>
    %92 = tpu.matmul %47, %91, %cst_107 {dimension_numbers = #tpu.dot_dimension_numbers<[1], [0], [0], [1], [0, 0, 1, 1], [], []>} : vector<64x78xf32>, vector<78x80xf32>, vector<64x80xf32> -> vector<64x80xf32>
    %93 = arith.addf %89, %92 : vector<64x80xf32>
    %94 = arith.maximumf %82, %93 : vector<64x80xf32>
    %c0_108 = arith.constant 0 : index
    %c0_109 = arith.constant 0 : index
    %95 = vector.load %arg6[%c0_108, %c0_109] : memref<1x80xf32, #tpu.memory_space<vmem>>, vector<1x80xf32>
    %96 = vector.broadcast %95 : vector<1x80xf32> to vector<64x80xf32>
    %97 = arith.addf %94, %96 : vector<64x80xf32>
    %cst_110 = arith.constant 0.000000e+00 : f32
    %98 = vector.broadcast %cst_110 : f32 to vector<64x80xf32>
    %99 = arith.maximumf %97, %98 : vector<64x80xf32>
    %cst_111 = arith.constant 0.000000e+00 : f32
    %100 = vector.broadcast %cst_111 : f32 to vector<8x80xf32>
    %101 = tpu.concatenate %99, %100 in 0 : vector<64x80xf32>, vector<8x80xf32> -> vector<72x80xf32>
    %c0_112 = arith.constant 0 : index
    %c0_113 = arith.constant 0 : index
    %c0_114 = arith.constant 0 : index
    %102 = vector.load %arg7[%c0_112, %c0_113, %c0_114] : memref<5x80x120xf32, #tpu.memory_space<vmem>>, vector<1x80x120xf32>
    %103 = vector.shape_cast %102 : vector<1x80x120xf32> to vector<80x120xf32>
    %cst_115 = arith.constant dense<0.000000e+00> : vector<64x120xf32>
    %104 = tpu.matmul %99, %103, %cst_115 {dimension_numbers = #tpu.dot_dimension_numbers<[1], [0], [0], [1], [0, 0, 1, 1], [], []>} : vector<64x80xf32>, vector<80x120xf32>, vector<64x120xf32> -> vector<64x120xf32>
    %105 = vector.extract_strided_slice %101 {offsets = [1, 0], sizes = [64, 80], strides = [1, 1]} : vector<72x80xf32> to vector<64x80xf32>
    %c1_116 = arith.constant 1 : index
    %c0_117 = arith.constant 0 : index
    %c0_118 = arith.constant 0 : index
    %106 = vector.load %arg7[%c1_116, %c0_117, %c0_118] : memref<5x80x120xf32, #tpu.memory_space<vmem>>, vector<1x80x120xf32>
    %107 = vector.shape_cast %106 : vector<1x80x120xf32> to vector<80x120xf32>
    %cst_119 = arith.constant dense<0.000000e+00> : vector<64x120xf32>
    %108 = tpu.matmul %105, %107, %cst_119 {dimension_numbers = #tpu.dot_dimension_numbers<[1], [0], [0], [1], [0, 0, 1, 1], [], []>} : vector<64x80xf32>, vector<80x120xf32>, vector<64x120xf32> -> vector<64x120xf32>
    %109 = arith.addf %104, %108 : vector<64x120xf32>
    %110 = vector.extract_strided_slice %101 {offsets = [2, 0], sizes = [64, 80], strides = [1, 1]} : vector<72x80xf32> to vector<64x80xf32>
    %c2_120 = arith.constant 2 : index
    %c0_121 = arith.constant 0 : index
    %c0_122 = arith.constant 0 : index
    %111 = vector.load %arg7[%c2_120, %c0_121, %c0_122] : memref<5x80x120xf32, #tpu.memory_space<vmem>>, vector<1x80x120xf32>
    %112 = vector.shape_cast %111 : vector<1x80x120xf32> to vector<80x120xf32>
    %cst_123 = arith.constant dense<0.000000e+00> : vector<64x120xf32>
    %113 = tpu.matmul %110, %112, %cst_123 {dimension_numbers = #tpu.dot_dimension_numbers<[1], [0], [0], [1], [0, 0, 1, 1], [], []>} : vector<64x80xf32>, vector<80x120xf32>, vector<64x120xf32> -> vector<64x120xf32>
    %114 = arith.addf %109, %113 : vector<64x120xf32>
    %115 = vector.extract_strided_slice %101 {offsets = [3, 0], sizes = [64, 80], strides = [1, 1]} : vector<72x80xf32> to vector<64x80xf32>
    %c3 = arith.constant 3 : index
    %c0_124 = arith.constant 0 : index
    %c0_125 = arith.constant 0 : index
    %116 = vector.load %arg7[%c3, %c0_124, %c0_125] : memref<5x80x120xf32, #tpu.memory_space<vmem>>, vector<1x80x120xf32>
    %117 = vector.shape_cast %116 : vector<1x80x120xf32> to vector<80x120xf32>
    %cst_126 = arith.constant dense<0.000000e+00> : vector<64x120xf32>
    %118 = tpu.matmul %115, %117, %cst_126 {dimension_numbers = #tpu.dot_dimension_numbers<[1], [0], [0], [1], [0, 0, 1, 1], [], []>} : vector<64x80xf32>, vector<80x120xf32>, vector<64x120xf32> -> vector<64x120xf32>
    %119 = arith.addf %114, %118 : vector<64x120xf32>
    %120 = vector.extract_strided_slice %101 {offsets = [4, 0], sizes = [64, 80], strides = [1, 1]} : vector<72x80xf32> to vector<64x80xf32>
    %c4 = arith.constant 4 : index
    %c0_127 = arith.constant 0 : index
    %c0_128 = arith.constant 0 : index
    %121 = vector.load %arg7[%c4, %c0_127, %c0_128] : memref<5x80x120xf32, #tpu.memory_space<vmem>>, vector<1x80x120xf32>
    %122 = vector.shape_cast %121 : vector<1x80x120xf32> to vector<80x120xf32>
    %cst_129 = arith.constant dense<0.000000e+00> : vector<64x120xf32>
    %123 = tpu.matmul %120, %122, %cst_129 {dimension_numbers = #tpu.dot_dimension_numbers<[1], [0], [0], [1], [0, 0, 1, 1], [], []>} : vector<64x80xf32>, vector<80x120xf32>, vector<64x120xf32> -> vector<64x120xf32>
    %124 = arith.addf %119, %123 : vector<64x120xf32>
    %c0_130 = arith.constant 0 : index
    %c0_131 = arith.constant 0 : index
    %125 = vector.load %arg8[%c0_130, %c0_131] : memref<1x120xf32, #tpu.memory_space<vmem>>, vector<1x120xf32>
    %126 = vector.broadcast %125 : vector<1x120xf32> to vector<64x120xf32>
    %127 = arith.addf %124, %126 : vector<64x120xf32>
    %cst_132 = arith.constant 0.000000e+00 : f32
    %128 = vector.broadcast %cst_132 : f32 to vector<64x120xf32>
    %129 = arith.maximumf %127, %128 : vector<64x120xf32>
    %c0_133 = arith.constant 0 : index
    %c0_134 = arith.constant 0 : index
    %130 = vector.load %arg9[%c0_133, %c0_134] : memref<120x84xf32, #tpu.memory_space<vmem>>, vector<120x84xf32>
    %cst_135 = arith.constant dense<0.000000e+00> : vector<64x84xf32>
    %131 = tpu.matmul %129, %130, %cst_135 {dimension_numbers = #tpu.dot_dimension_numbers<[1], [0], [0], [1], [0, 0, 1, 1], [], []>} : vector<64x120xf32>, vector<120x84xf32>, vector<64x84xf32> -> vector<64x84xf32>
    %c0_136 = arith.constant 0 : index
    %c0_137 = arith.constant 0 : index
    %132 = vector.load %arg10[%c0_136, %c0_137] : memref<1x84xf32, #tpu.memory_space<vmem>>, vector<1x84xf32>
    %133 = vector.broadcast %132 : vector<1x84xf32> to vector<64x84xf32>
    %134 = arith.addf %131, %133 : vector<64x84xf32>
    %cst_138 = arith.constant 0.000000e+00 : f32
    %135 = vector.broadcast %cst_138 : f32 to vector<64x84xf32>
    %136 = arith.maximumf %134, %135 : vector<64x84xf32>
    %c0_139 = arith.constant 0 : index
    %c0_140 = arith.constant 0 : index
    %137 = vector.load %arg11[%c0_139, %c0_140] : memref<84x10xf32, #tpu.memory_space<vmem>>, vector<84x10xf32>
    %cst_141 = arith.constant dense<0.000000e+00> : vector<64x10xf32>
    %138 = tpu.matmul %136, %137, %cst_141 {dimension_numbers = #tpu.dot_dimension_numbers<[1], [0], [0], [1], [0, 0, 1, 1], [], []>} : vector<64x84xf32>, vector<84x10xf32>, vector<64x10xf32> -> vector<64x10xf32>
    %c0_142 = arith.constant 0 : index
    %c0_143 = arith.constant 0 : index
    %139 = vector.load %arg12[%c0_142, %c0_143] : memref<1x10xf32, #tpu.memory_space<vmem>>, vector<1x10xf32>
    %140 = vector.broadcast %139 : vector<1x10xf32> to vector<64x10xf32>
    %141 = arith.addf %138, %140 : vector<64x10xf32>
    %cst_144 = arith.constant dense<0xFF800000> : vector<64xf32>
    %142 = vector.multi_reduction <maximumf>, %141, %cst_144 [1] : vector<64x10xf32> to vector<64xf32>
    %143 = vector.shape_cast %142 : vector<64xf32> to vector<64x1xf32>
    %144 = vector.broadcast %143 : vector<64x1xf32> to vector<64x10xf32>
    %145 = arith.subf %141, %144 : vector<64x10xf32>
    %146 = math.exp %145 : vector<64x10xf32>
    %cst_145 = arith.constant dense<0.000000e+00> : vector<64xf32>
    %147 = vector.multi_reduction <add>, %146, %cst_145 [1] : vector<64x10xf32> to vector<64xf32>
    %148 = vector.shape_cast %147 : vector<64xf32> to vector<64x1xf32>
    %149 = math.log %148 : vector<64x1xf32>
    %150 = vector.broadcast %149 : vector<64x1xf32> to vector<64x10xf32>
    %151 = arith.subf %145, %150 : vector<64x10xf32>
    %c0_146 = arith.constant 0 : index
    %c0_147 = arith.constant 0 : index
    %152 = vector.load %arg13[%c0_146, %c0_147] : memref<64x10xf32, #tpu.memory_space<vmem>>, vector<64x10xf32>
    tpu.vector_store %arg13[%c0_146, %c0_147], %151 {strides = array<i32>} : memref<64x10xf32, #tpu.memory_space<vmem>>, vector<64x10xf32>,
    return
  }
  func.func @transform_0(%arg0: i32) -> (i32, i32) {
    %c0_i32 = arith.constant 0 : i32
    %c0_i32_0 = arith.constant 0 : i32
    return %arg0, %c0_i32 : i32, i32
  }
  func.func @transform_1(%arg0: i32) -> (i32, i32) {
    %c0_i32 = arith.constant 0 : i32
    %c0_i32_0 = arith.constant 0 : i32
    return %arg0, %c0_i32 : i32, i32
  }
  func.func @transform_2(%arg0: i32) -> (i32, i32, i32, i32) {
    %c0_i32 = arith.constant 0 : i32
    %c0_i32_0 = arith.constant 0 : i32
    %c0_i32_1 = arith.constant 0 : i32
    %c0_i32_2 = arith.constant 0 : i32
    %c0_i32_3 = arith.constant 0 : i32
    return %c0_i32, %c0_i32_0, %c0_i32_1, %c0_i32_2 : i32, i32, i32, i32
  }
  func.func @transform_3(%arg0: i32) -> (i32, i32) {
    %c0_i32 = arith.constant 0 : i32
    %c0_i32_0 = arith.constant 0 : i32
    %c0_i32_1 = arith.constant 0 : i32
    return %c0_i32, %c0_i32_0 : i32, i32
  }
  func.func @transform_4(%arg0: i32) -> (i32, i32, i32, i32) {
    %c0_i32 = arith.constant 0 : i32
    %c0_i32_0 = arith.constant 0 : i32
    %c0_i32_1 = arith.constant 0 : i32
    %c0_i32_2 = arith.constant 0 : i32
    %c0_i32_3 = arith.constant 0 : i32
    return %c0_i32, %c0_i32_0, %c0_i32_1, %c0_i32_2 : i32, i32, i32, i32
  }
  func.func @transform_5(%arg0: i32) -> (i32, i32) {
    %c0_i32 = arith.constant 0 : i32
    %c0_i32_0 = arith.constant 0 : i32
    %c0_i32_1 = arith.constant 0 : i32
    return %c0_i32, %c0_i32_0 : i32, i32
  }
  func.func @transform_6(%arg0: i32) -> (i32, i32, i32) {
    %c0_i32 = arith.constant 0 : i32
    %c0_i32_0 = arith.constant 0 : i32
    %c0_i32_1 = arith.constant 0 : i32
    %c0_i32_2 = arith.constant 0 : i32
    return %c0_i32, %c0_i32_0, %c0_i32_1 : i32, i32, i32
  }
  func.func @transform_7(%arg0: i32) -> (i32, i32) {
    %c0_i32 = arith.constant 0 : i32
    %c0_i32_0 = arith.constant 0 : i32
    %c0_i32_1 = arith.constant 0 : i32
    return %c0_i32, %c0_i32_0 : i32, i32
  }
  func.func @transform_8(%arg0: i32) -> (i32, i32) {
    %c0_i32 = arith.constant 0 : i32
    %c0_i32_0 = arith.constant 0 : i32
    %c0_i32_1 = arith.constant 0 : i32
    return %c0_i32, %c0_i32_0 : i32, i32
  }
  func.func @transform_9(%arg0: i32) -> (i32, i32) {
    %c0_i32 = arith.constant 0 : i32
    %c0_i32_0 = arith.constant 0 : i32
    %c0_i32_1 = arith.constant 0 : i32
    return %c0_i32, %c0_i32_0 : i32, i32
  }
  func.func @transform_10(%arg0: i32) -> (i32, i32) {
    %c0_i32 = arith.constant 0 : i32
    %c0_i32_0 = arith.constant 0 : i32
    %c0_i32_1 = arith.constant 0 : i32
    return %c0_i32, %c0_i32_0 : i32, i32
  }
  func.func @transform_11(%arg0: i32) -> (i32, i32) {
    %c0_i32 = arith.constant 0 : i32
    %c0_i32_0 = arith.constant 0 : i32
    %c0_i32_1 = arith.constant 0 : i32
    return %c0_i32, %c0_i32_0 : i32, i32
  }
  func.func @transform_12(%arg0: i32) -> (i32, i32) {
    %c0_i32 = arith.constant 0 : i32
    %c0_i32_0 = arith.constant 0 : i32
    return %arg0, %c0_i32 : i32, i32
  }
}

</mosaic_0001>

<llo_original>
// kernel: tile.13
$region0: #{tile.13}
  #allocation0 [shape = 's32[1]{0}', space=sflag, size = 0x4, scoped, tag = 'scoped memory for tile.13']
  %s0 = inlined_call_operand.vmem [shape: f32[6], index: 0, kind: input, shape index: {}]
  %s1 = inlined_call_operand.vmem [shape: f32[13,6], index: 1, kind: output, shape index: {}]
  // Predicated region
  $region2: #{tile.13} parent=0 // pred_check
    _
  $region3: #{tile.13} parent=0 // pred_check_branch
    %3 = sbr.rel (0) target = $region5
  $region4: #{tile.13} parent=0 // pred_region
    _
  $region5: #{tile.13} parent=0 // pred_fallthru
    _
  %v4 = vld [vmem:[%s0] ss:$0 sm:$0xff]
  %5 = vst [vmem:[%s1] sm:$0xff] %v4
  %s6 = scalar_lea.vmem %s1, 8
  %7 = vst [vmem:[%s6] sm:$0xff] %v4

// kernel: tile.14
$region0: #{tile.14}
  %s0 = inlined_call_operand.vmem [shape: f32[13,6], index: 0, kind: input, shape index: {}]
  %s1 = inlined_call_operand.vmem [shape: f32[1,78], index: 1, kind: output, shape index: {}]
  $region1: #{tile.14} parent=0
    #allocation0 [shape = 'u8[4096]{0}', space=vmem, size = 0x1000, scoped, tag = 'scoped mem for output reshape']
    %v2 = vld [vmem:[%s0] sm:$0x1]
    %vm3 = vcmask 48128
    %4 = vst.msk [vmem:[#allocation0] sm:$0x1] %vm3, %v2
    %s5 = scalar_lea.vmem %s0, 12
    %v6 = vld [vmem:[%s5] sm:$0x1]
    %7 = vrot.lane.b32.xlu0 %v6, 72
    %v8 = vpop.permute.xlu0 %7
    %vm9 = vcmask 638528
    %10 = vst.msk [vmem:[#allocation0] sm:$0x1] %vm9, %v8
    %s11 = scalar_lea.vmem %s0, 11
    %v12 = vld [vmem:[%s11] sm:$0x1]
    %13 = vrot.lane.b32.xlu0 %v12, 66
    %v14 = vpop.permute.xlu0 %13
    %vm15 = vcmask 589328
    %16 = vst.msk [vmem:[#allocation0] sm:$0x1] %vm15, %v14
    %s17 = scalar_lea.vmem %s0, 10
    %v18 = vld [vmem:[%s17] sm:$0x1]
    %19 = vrot.lane.b32.xlu0 %v18, 60
    %v20 = vpop.permute.xlu0 %19
    %vm21 = vcmask 540128
    %22 = vst.msk [vmem:[#allocation0] sm:$0x1] %vm21, %v20
    %s23 = scalar_lea.vmem %s0, 9
    %v24 = vld [vmem:[%s23] sm:$0x1]
    %25 = vrot.lane.b32.xlu0 %v24, 54
    %v26 = vpop.permute.xlu0 %25
    %vm27 = vcmask 490928
    %28 = vst.msk [vmem:[#allocation0] sm:$0x1] %vm27, %v26
    %s29 = scalar_lea.vmem %s0, 8
    %v30 = vld [vmem:[%s29] sm:$0x1]
    %31 = vrot.lane.b32.xlu0 %v30, 48
    %v32 = vpop.permute.xlu0 %31
    %vm33 = vcmask 441728
    %34 = vst.msk [vmem:[#allocation0] sm:$0x1] %vm33, %v32
    %s35 = scalar_lea.vmem %s0, 7
    %v36 = vld [vmem:[%s35] sm:$0x1]
    %37 = vrot.lane.b32.xlu0 %v36, 42
    %v38 = vpop.permute.xlu0 %37
    %vm39 = vcmask 392528
    %40 = vst.msk [vmem:[#allocation0] sm:$0x1] %vm39, %v38
    %s41 = scalar_lea.vmem %s0, 6
    %v42 = vld [vmem:[%s41] sm:$0x1]
    %43 = vrot.lane.b32.xlu0 %v42, 36
    %v44 = vpop.permute.xlu0 %43
    %vm45 = vcmask 343328
    %46 = vst.msk [vmem:[#allocation0] sm:$0x1] %vm45, %v44
    %s47 = scalar_lea.vmem %s0, 5
    %v48 = vld [vmem:[%s47] sm:$0x1]
    %49 = vrot.lane.b32.xlu0 %v48, 30
    %v50 = vpop.permute.xlu0 %49
    %vm51 = vcmask 294128
    %52 = vst.msk [vmem:[#allocation0] sm:$0x1] %vm51, %v50
    %s53 = scalar_lea.vmem %s0, 4
    %v54 = vld [vmem:[%s53] sm:$0x1]
    %55 = vrot.lane.b32.xlu0 %v54, 24
    %v56 = vpop.permute.xlu0 %55
    %vm57 = vcmask 244928
    %58 = vst.msk [vmem:[#allocation0] sm:$0x1] %vm57, %v56
    %s59 = scalar_lea.vmem %s0, 3
    %v60 = vld [vmem:[%s59] sm:$0x1]
    %61 = vrot.lane.b32.xlu0 %v60, 18
    %v62 = vpop.permute.xlu0 %61
    %vm63 = vcmask 195728
    %64 = vst.msk [vmem:[#allocation0] sm:$0x1] %vm63, %v62
    %s65 = scalar_lea.vmem %s0, 2
    %v66 = vld [vmem:[%s65] sm:$0x1]
    %67 = vrot.lane.b32.xlu0 %v66, 12
    %v68 = vpop.permute.xlu0 %67
    %vm69 = vcmask 146528
    %70 = vst.msk [vmem:[#allocation0] sm:$0x1] %vm69, %v68
    %s71 = scalar_lea.vmem %s0, 1
    %v72 = vld [vmem:[%s71] sm:$0x1]
    %73 = vrot.lane.b32.xlu0 %v72, 6
    %v74 = vpop.permute.xlu0 %73
    %vm75 = vcmask 97328
    %76 = vst.msk [vmem:[#allocation0] sm:$0x1] %vm75, %v74
    %s78 = ssub.s32 2, 1
    %v79 = vld [vmem:[#allocation0] sm:%s78]
    %s81 = ssub.s32 2, 1
    %82 = vst [vmem:[%s1] sm:%s81] %v79

// kernel: tile.18
$region0: #{tile.18}
  #allocation0 [shape = 's32[1]{0}', space=sflag, size = 0x4, scoped, tag = 'scoped memory for tile.18']
  %s0 = inlined_call_operand.vmem [shape: f32[16], index: 0, kind: input, shape index: {}]
  %s1 = inlined_call_operand.vmem [shape: f32[5,16], index: 1, kind: output, shape index: {}]
  // Predicated region
  $region2: #{tile.18} parent=0 // pred_check
    _
  $region3: #{tile.18} parent=0 // pred_check_branch
    %3 = sbr.rel (0) target = $region5
  $region4: #{tile.18} parent=0 // pred_region
    _
  $region5: #{tile.18} parent=0 // pred_fallthru
    _
  %v4 = vld [vmem:[%s0] ss:$0 sm:$0xff]
  %5 = vst [vmem:[%s1] sm:$0xff] %v4

// kernel: tile.19
$region0: #{tile.19}
  %s0 = inlined_call_operand.vmem [shape: f32[5,16], index: 0, kind: input, shape index: {}]
  %s1 = inlined_call_operand.vmem [shape: f32[1,80], index: 1, kind: output, shape index: {}]
  $region1: #{tile.19} parent=0
    #allocation0 [shape = 'u8[4096]{0}', space=vmem, size = 0x1000, scoped, tag = 'scoped mem for output reshape']
    %v2 = vld [vmem:[%s0] sm:$0x1]
    %vm3 = vcmask 130048
    %4 = vst.msk [vmem:[#allocation0] sm:$0x1] %vm3, %v2
    %s5 = scalar_lea.vmem %s0, 4
    %v6 = vld [vmem:[%s5] sm:$0x1]
    %7 = vrot.lane.b32.xlu0 %v6, 64
    %v8 = vpop.permute.xlu0 %7
    %vm9 = vcmask 654848
    %10 = vst.msk [vmem:[#allocation0] sm:$0x1] %vm9, %v8
    %s11 = scalar_lea.vmem %s0, 3
    %v12 = vld [vmem:[%s11] sm:$0x1]
    %13 = vrot.lane.b32.xlu0 %v12, 48
    %v14 = vpop.permute.xlu0 %13
    %vm15 = vcmask 523648
    %16 = vst.msk [vmem:[#allocation0] sm:$0x1] %vm15, %v14
    %s17 = scalar_lea.vmem %s0, 2
    %v18 = vld [vmem:[%s17] sm:$0x1]
    %19 = vrot.lane.b32.xlu0 %v18, 32
    %v20 = vpop.permute.xlu0 %19
    %vm21 = vcmask 392448
    %22 = vst.msk [vmem:[#allocation0] sm:$0x1] %vm21, %v20
    %s23 = scalar_lea.vmem %s0, 1
    %v24 = vld [vmem:[%s23] sm:$0x1]
    %25 = vrot.lane.b32.xlu0 %v24, 16
    %v26 = vpop.permute.xlu0 %25
    %vm27 = vcmask 261248
    %28 = vst.msk [vmem:[#allocation0] sm:$0x1] %vm27, %v26
    %s30 = ssub.s32 2, 1
    %v31 = vld [vmem:[#allocation0] sm:%s30]
    %s33 = ssub.s32 2, 1
    %34 = vst [vmem:[%s1] sm:%s33] %v31

// kernel: convolutional_network_forward.1
$region0: #{convolutional_network_forward.1}
  #allocation0 [shape = 'u32[]', space=smem, size = 0x4, offset = 0x4, fixed_abs, tag = 'smem constant byte address 0x4 - core index']
  #allocation1 [shape = 'u32[72,128]{1,0:T(1,128)}', space=vmem, size = 0x9000, scoped, tag = 'internal scratch']
  %s0 = inlined_call_operand.vmem [shape: f32[64,112], index: 0, kind: input, shape index: {}]
  %s1 = inlined_call_operand.vmem [shape: f32[64,112], index: 1, kind: input, shape index: {}]
  %s2 = inlined_call_operand.vmem [shape: f32[2,2,112,78], index: 2, kind: input, shape index: {}]
  %s3 = inlined_call_operand.vmem [shape: f32[1,78], index: 3, kind: input, shape index: {}]
  %s4 = inlined_call_operand.vmem [shape: f32[2,3,78,80], index: 4, kind: input, shape index: {}]
  %s5 = inlined_call_operand.vmem [shape: f32[1,80], index: 5, kind: input, shape index: {}]
  %s6 = inlined_call_operand.vmem [shape: f32[5,80,120], index: 6, kind: input, shape index: {}]
  %s7 = inlined_call_operand.vmem [shape: f32[1,120], index: 7, kind: input, shape index: {}]
  %s8 = inlined_call_operand.vmem [shape: f32[120,84], index: 8, kind: input, shape index: {}]
  %s9 = inlined_call_operand.vmem [shape: f32[1,84], index: 9, kind: input, shape index: {}]
  %s10 = inlined_call_operand.vmem [shape: f32[84,10], index: 10, kind: input, shape index: {}]
  %s11 = inlined_call_operand.vmem [shape: f32[1,10], index: 11, kind: input, shape index: {}]
  %s12 = inlined_call_operand.vmem [shape: f32[64,10], index: 12, kind: output, shape index: {}]
  %s13 = sld [smem:[#allocation0]]
  $region58: #{convolutional_network_forward.1} parent=0
    _
  %s15 = ssub.s32 1, %s13
  %s16 = scalar_select 0, %s15, %s13
  // Predicated region
  $region2: #{convolutional_network_forward.1} parent=0 // pred_check
    _
  $region3: #{convolutional_network_forward.1} parent=0 // pred_check_branch
    %18 = sbr.rel (0) target = $region5
  $region4: #{convolutional_network_forward.1} parent=0 // pred_region
    _
  $region5: #{convolutional_network_forward.1} parent=0 // pred_fallthru
    _
  // Predicated region
  $region6: #{convolutional_network_forward.1} parent=0 // pred_check
    _
  $region7: #{convolutional_network_forward.1} parent=0 // pred_check_branch
    %20 = sbr.rel (0) target = $region9
  $region8: #{convolutional_network_forward.1} parent=0 // pred_region
    _
  $region9: #{convolutional_network_forward.1} parent=0 // pred_fallthru
    _
  // Predicated region
  $region10: #{convolutional_network_forward.1} parent=0 // pred_check
    _
  $region11: #{convolutional_network_forward.1} parent=0 // pred_check_branch
    %22 = sbr.rel (0) target = $region13
  $region12: #{convolutional_network_forward.1} parent=0 // pred_region
    _
  $region13: #{convolutional_network_forward.1} parent=0 // pred_fallthru
    _
  // Predicated region
  $region14: #{convolutional_network_forward.1} parent=0 // pred_check
    _
  $region15: #{convolutional_network_forward.1} parent=0 // pred_check_branch
    %24 = sbr.rel (0) target = $region17
  $region16: #{convolutional_network_forward.1} parent=0 // pred_region
    _
  $region17: #{convolutional_network_forward.1} parent=0 // pred_fallthru
    _
  // Predicated region
  $region18: #{convolutional_network_forward.1} parent=0 // pred_check
    _
  $region19: #{convolutional_network_forward.1} parent=0 // pred_check_branch
    %26 = sbr.rel (0) target = $region21
  $region20: #{convolutional_network_forward.1} parent=0 // pred_region
    _
  $region21: #{convolutional_network_forward.1} parent=0 // pred_fallthru
    _
  // Predicated region
  $region22: #{convolutional_network_forward.1} parent=0 // pred_check
    _
  $region23: #{convolutional_network_forward.1} parent=0 // pred_check_branch
    %28 = sbr.rel (0) target = $region25
  $region24: #{convolutional_network_forward.1} parent=0 // pred_region
    _
  $region25: #{convolutional_network_forward.1} parent=0 // pred_fallthru
    _
  // Predicated region
  $region26: #{convolutional_network_forward.1} parent=0 // pred_check
    _
  $region27: #{convolutional_network_forward.1} parent=0 // pred_check_branch
    %30 = sbr.rel (0) target = $region29
  $region28: #{convolutional_network_forward.1} parent=0 // pred_region
    _
  $region29: #{convolutional_network_forward.1} parent=0 // pred_fallthru
    _
  // Predicated region
  $region30: #{convolutional_network_forward.1} parent=0 // pred_check
    _
  $region31: #{convolutional_network_forward.1} parent=0 // pred_check_branch
    %32 = sbr.rel (0) target = $region33
  $region32: #{convolutional_network_forward.1} parent=0 // pred_region
    _
  $region33: #{convolutional_network_forward.1} parent=0 // pred_fallthru
    _
  // Predicated region
  $region34: #{convolutional_network_forward.1} parent=0 // pred_check
    _
  $region35: #{convolutional_network_forward.1} parent=0 // pred_check_branch
    %34 = sbr.rel (0) target = $region37
  $region36: #{convolutional_network_forward.1} parent=0 // pred_region
    _
  $region37: #{convolutional_network_forward.1} parent=0 // pred_fallthru
    _
  // Predicated region
  $region38: #{convolutional_network_forward.1} parent=0 // pred_check
    _
  $region39: #{convolutional_network_forward.1} parent=0 // pred_check_branch
    %36 = sbr.rel (0) target = $region41
  $region40: #{convolutional_network_forward.1} parent=0 // pred_region
    _
  $region41: #{convolutional_network_forward.1} parent=0 // pred_fallthru
    _
  // Predicated region
  $region42: #{convolutional_network_forward.1} parent=0 // pred_check
    _
  $region43: #{convolutional_network_forward.1} parent=0 // pred_check_branch
    %38 = sbr.rel (0) target = $region45
  $region44: #{convolutional_network_forward.1} parent=0 // pred_region
    _
  $region45: #{convolutional_network_forward.1} parent=0 // pred_fallthru
    _
  // Predicated region
  $region46: #{convolutional_network_forward.1} parent=0 // pred_check
    _
  $region47: #{convolutional_network_forward.1} parent=0 // pred_check_branch
    %40 = sbr.rel (0) target = $region49
  $region48: #{convolutional_network_forward.1} parent=0 // pred_region
    _
  $region49: #{convolutional_network_forward.1} parent=0 // pred_fallthru
    _
  %v41 = vld [vmem:[%s0] sm:$0xff]
  %v42 = vld [vmem:[%s0 + $0x8] sm:$0xff]
  %v43 = vld [vmem:[%s0 + $0x10] sm:$0xff]
  %v44 = vld [vmem:[%s0 + $0x18] sm:$0xff]
  %v45 = vld [vmem:[%s0 + $0x20] sm:$0xff]
  %v46 = vld [vmem:[%s0 + $0x28] sm:$0xff]
  %v47 = vld [vmem:[%s0 + $0x30] sm:$0xff]
  %v48 = vld [vmem:[%s0 + $0x38] sm:$0xff]
  %v49 = vld [vmem:[%s2] sm:$0xff]
  %v50 = vld [vmem:[%s2 + $0x8] sm:$0xff]
  %v51 = vld [vmem:[%s2 + $0x10] sm:$0xff]
  %v52 = vld [vmem:[%s2 + $0x18] sm:$0xff]
  %v53 = vld [vmem:[%s2 + $0x20] sm:$0xff]
  %v54 = vld [vmem:[%s2 + $0x28] sm:$0xff]
  %v55 = vld [vmem:[%s2 + $0x30] sm:$0xff]
  %v56 = vld [vmem:[%s2 + $0x38] sm:$0xff]
  %v57 = vld [vmem:[%s2 + $0x40] sm:$0xff]
  %v58 = vld [vmem:[%s2 + $0x48] sm:$0xff]
  %v59 = vld [vmem:[%s2 + $0x50] sm:$0xff]
  %v60 = vld [vmem:[%s2 + $0x58] sm:$0xff]
  %v61 = vld [vmem:[%s2 + $0x60] sm:$0xff]
  %v62 = vld [vmem:[%s2 + $0x68] sm:$0xff]
  %vm63 = vcmask 916480
  %v65 = vsel %vm63, %v41, 0
  %v68 = vsel %vm63, %v42, 0
  %v71 = vsel %vm63, %v43, 0
  %v74 = vsel %vm63, %v44, 0
  %v77 = vsel %vm63, %v45, 0
  %v80 = vsel %vm63, %v46, 0
  %v83 = vsel %vm63, %v47, 0
  %v86 = vsel %vm63, %v48, 0
  %88 = vmatpush.msra.mxu0 0.0
  %89 = vmatpush.msra.mxu0 0.0
  %90 = vmatpush.msra.mxu0 %v62
  %91 = vmatpush.msra.mxu0 %v61
  %92 = vmatpush.msra.mxu0 %v60
  %93 = vmatpush.msra.mxu0 %v59
  %94 = vmatpush.msra.mxu0 %v58
  %95 = vmatpush.msra.mxu0 %v57
  %96 = vmatpush.msra.mxu0 %v56
  %97 = vmatpush.msra.mxu0 %v55
  %98 = vmatpush.msra.mxu0 %v54
  %99 = vmatpush.msra.mxu0 %v53
  %100 = vmatpush.msra.mxu0 %v52
  %101 = vmatpush.msra.mxu0 %v51
  %102 = vmatpush.msra.mxu0 %v50
  %103 = vmatpush.msra.mxu0 %v49
  %104 = vmatmul.f32.gmra.mxu0 %v65
  %v105 = vpop.f32.mrf.mxu0
  %v106 = vadd.f32 0.0, %v105
  %107 = vmatmul.f32.gmra.mxu0 %v68
  %v108 = vpop.f32.mrf.mxu0
  %v109 = vadd.f32 0.0, %v108
  %110 = vmatmul.f32.gmra.mxu0 %v71
  %v111 = vpop.f32.mrf.mxu0
  %v112 = vadd.f32 0.0, %v111
  %113 = vmatmul.f32.gmra.mxu0 %v74
  %v114 = vpop.f32.mrf.mxu0
  %v115 = vadd.f32 0.0, %v114
  %116 = vmatmul.f32.gmra.mxu0 %v77
  %v117 = vpop.f32.mrf.mxu0
  %v118 = vadd.f32 0.0, %v117
  %119 = vmatmul.f32.gmra.mxu0 %v80
  %v120 = vpop.f32.mrf.mxu0
  %v121 = vadd.f32 0.0, %v120
  %122 = vmatmul.f32.gmra.mxu0 %v83
  %v123 = vpop.f32.mrf.mxu0
  %v124 = vadd.f32 0.0, %v123
  %125 = vmatmul.f32.gmra.mxu0 %v86
  %v126 = vpop.f32.mrf.mxu0
  %v127 = vadd.f32 0.0, %v126
  %128 = vdwg.mxu0
  %s129 = scalar_lea.vmem %s2, 112
  %v130 = vld [vmem:[%s129] sm:$0xff]
  %v131 = vld [vmem:[%s129 + $0x8] sm:$0xff]
  %v132 = vld [vmem:[%s129 + $0x10] sm:$0xff]
  %v133 = vld [vmem:[%s129 + $0x18] sm:$0xff]
  %v134 = vld [vmem:[%s129 + $0x20] sm:$0xff]
  %v135 = vld [vmem:[%s129 + $0x28] sm:$0xff]
  %v136 = vld [vmem:[%s129 + $0x30] sm:$0xff]
  %v137 = vld [vmem:[%s129 + $0x38] sm:$0xff]
  %v138 = vld [vmem:[%s129 + $0x40] sm:$0xff]
  %v139 = vld [vmem:[%s129 + $0x48] sm:$0xff]
  %v140 = vld [vmem:[%s129 + $0x50] sm:$0xff]
  %v141 = vld [vmem:[%s129 + $0x58] sm:$0xff]
  %v142 = vld [vmem:[%s129 + $0x60] sm:$0xff]
  %v143 = vld [vmem:[%s129 + $0x68] sm:$0xff]
  %144 = vmatpush.msra.mxu0 0.0
  %145 = vmatpush.msra.mxu0 0.0
  %146 = vmatpush.msra.mxu0 %v143
  %147 = vmatpush.msra.mxu0 %v142
  %148 = vmatpush.msra.mxu0 %v141
  %149 = vmatpush.msra.mxu0 %v140
  %150 = vmatpush.msra.mxu0 %v139
  %151 = vmatpush.msra.mxu0 %v138
  %152 = vmatpush.msra.mxu0 %v137
  %153 = vmatpush.msra.mxu0 %v136
  %154 = vmatpush.msra.mxu0 %v135
  %155 = vmatpush.msra.mxu0 %v134
  %156 = vmatpush.msra.mxu0 %v133
  %157 = vmatpush.msra.mxu0 %v132
  %158 = vmatpush.msra.mxu0 %v131
  %159 = vmatpush.msra.mxu0 %v130
  %160 = vmatmul.f32.gmra.mxu0 %v65
  %v161 = vpop.f32.mrf.mxu0
  %v162 = vadd.f32 0.0, %v161
  %163 = vmatmul.f32.gmra.mxu0 %v68
  %v164 = vpop.f32.mrf.mxu0
  %v165 = vadd.f32 0.0, %v164
  %166 = vmatmul.f32.gmra.mxu0 %v71
  %v167 = vpop.f32.mrf.mxu0
  %v168 = vadd.f32 0.0, %v167
  %169 = vmatmul.f32.gmra.mxu0 %v74
  %v170 = vpop.f32.mrf.mxu0
  %v171 = vadd.f32 0.0, %v170
  %172 = vmatmul.f32.gmra.mxu0 %v77
  %v173 = vpop.f32.mrf.mxu0
  %v174 = vadd.f32 0.0, %v173
  %175 = vmatmul.f32.gmra.mxu0 %v80
  %v176 = vpop.f32.mrf.mxu0
  %v177 = vadd.f32 0.0, %v176
  %178 = vmatmul.f32.gmra.mxu0 %v83
  %v179 = vpop.f32.mrf.mxu0
  %v180 = vadd.f32 0.0, %v179
  %181 = vmatmul.f32.gmra.mxu0 %v86
  %v182 = vpop.f32.mrf.mxu0
  %v183 = vadd.f32 0.0, %v182
  %184 = vdwg.mxu0
  %v185 = vmax.f32 %v106, %v162
  %v186 = vmax.f32 %v109, %v165
  %v187 = vmax.f32 %v112, %v168
  %v188 = vmax.f32 %v115, %v171
  %v189 = vmax.f32 %v118, %v174
  %v190 = vmax.f32 %v121, %v177
  %v191 = vmax.f32 %v124, %v180
  %v192 = vmax.f32 %v127, %v183
  %s193 = scalar_lea.vmem %s2, 224
  %v194 = vld [vmem:[%s193] sm:$0xff]
  %v195 = vld [vmem:[%s193 + $0x8] sm:$0xff]
  %v196 = vld [vmem:[%s193 + $0x10] sm:$0xff]
  %v197 = vld [vmem:[%s193 + $0x18] sm:$0xff]
  %v198 = vld [vmem:[%s193 + $0x20] sm:$0xff]
  %v199 = vld [vmem:[%s193 + $0x28] sm:$0xff]
  %v200 = vld [vmem:[%s193 + $0x30] sm:$0xff]
  %v201 = vld [vmem:[%s193 + $0x38] sm:$0xff]
  %v202 = vld [vmem:[%s193 + $0x40] sm:$0xff]
  %v203 = vld [vmem:[%s193 + $0x48] sm:$0xff]
  %v204 = vld [vmem:[%s193 + $0x50] sm:$0xff]
  %v205 = vld [vmem:[%s193 + $0x58] sm:$0xff]
  %v206 = vld [vmem:[%s193 + $0x60] sm:$0xff]
  %v207 = vld [vmem:[%s193 + $0x68] sm:$0xff]
  %208 = vmatpush.msra.mxu0 0.0
  %209 = vmatpush.msra.mxu0 0.0
  %210 = vmatpush.msra.mxu0 %v207
  %211 = vmatpush.msra.mxu0 %v206
  %212 = vmatpush.msra.mxu0 %v205
  %213 = vmatpush.msra.mxu0 %v204
  %214 = vmatpush.msra.mxu0 %v203
  %215 = vmatpush.msra.mxu0 %v202
  %216 = vmatpush.msra.mxu0 %v201
  %217 = vmatpush.msra.mxu0 %v200
  %218 = vmatpush.msra.mxu0 %v199
  %219 = vmatpush.msra.mxu0 %v198
  %220 = vmatpush.msra.mxu0 %v197
  %221 = vmatpush.msra.mxu0 %v196
  %222 = vmatpush.msra.mxu0 %v195
  %223 = vmatpush.msra.mxu0 %v194
  %224 = vmatmul.f32.gmra.mxu0 %v65
  %v225 = vpop.f32.mrf.mxu0
  %v226 = vadd.f32 0.0, %v225
  %227 = vmatmul.f32.gmra.mxu0 %v68
  %v228 = vpop.f32.mrf.mxu0
  %v229 = vadd.f32 0.0, %v228
  %230 = vmatmul.f32.gmra.mxu0 %v71
  %v231 = vpop.f32.mrf.mxu0
  %v232 = vadd.f32 0.0, %v231
  %233 = vmatmul.f32.gmra.mxu0 %v74
  %v234 = vpop.f32.mrf.mxu0
  %v235 = vadd.f32 0.0, %v234
  %236 = vmatmul.f32.gmra.mxu0 %v77
  %v237 = vpop.f32.mrf.mxu0
  %v238 = vadd.f32 0.0, %v237
  %239 = vmatmul.f32.gmra.mxu0 %v80
  %v240 = vpop.f32.mrf.mxu0
  %v241 = vadd.f32 0.0, %v240
  %242 = vmatmul.f32.gmra.mxu0 %v83
  %v243 = vpop.f32.mrf.mxu0
  %v244 = vadd.f32 0.0, %v243
  %245 = vmatmul.f32.gmra.mxu0 %v86
  %v246 = vpop.f32.mrf.mxu0
  %v247 = vadd.f32 0.0, %v246
  %248 = vdwg.mxu0
  %v249 = vmax.f32 %v185, %v226
  %v250 = vmax.f32 %v186, %v229
  %v251 = vmax.f32 %v187, %v232
  %v252 = vmax.f32 %v188, %v235
  %v253 = vmax.f32 %v189, %v238
  %v254 = vmax.f32 %v190, %v241
  %v255 = vmax.f32 %v191, %v244
  %v256 = vmax.f32 %v192, %v247
  %s257 = scalar_lea.vmem %s2, 336
  %v258 = vld [vmem:[%s257] sm:$0xff]
  %v259 = vld [vmem:[%s257 + $0x8] sm:$0xff]
  %v260 = vld [vmem:[%s257 + $0x10] sm:$0xff]
  %v261 = vld [vmem:[%s257 + $0x18] sm:$0xff]
  %v262 = vld [vmem:[%s257 + $0x20] sm:$0xff]
  %v263 = vld [vmem:[%s257 + $0x28] sm:$0xff]
  %v264 = vld [vmem:[%s257 + $0x30] sm:$0xff]
  %v265 = vld [vmem:[%s257 + $0x38] sm:$0xff]
  %v266 = vld [vmem:[%s257 + $0x40] sm:$0xff]
  %v267 = vld [vmem:[%s257 + $0x48] sm:$0xff]
  %v268 = vld [vmem:[%s257 + $0x50] sm:$0xff]
  %v269 = vld [vmem:[%s257 + $0x58] sm:$0xff]
  %v270 = vld [vmem:[%s257 + $0x60] sm:$0xff]
  %v271 = vld [vmem:[%s257 + $0x68] sm:$0xff]
  %272 = vmatpush.msra.mxu0 0.0
  %273 = vmatpush.msra.mxu0 0.0
  %274 = vmatpush.msra.mxu0 %v271
  %275 = vmatpush.msra.mxu0 %v270
  %276 = vmatpush.msra.mxu0 %v269
  %277 = vmatpush.msra.mxu0 %v268
  %278 = vmatpush.msra.mxu0 %v267
  %279 = vmatpush.msra.mxu0 %v266
  %280 = vmatpush.msra.mxu0 %v265
  %281 = vmatpush.msra.mxu0 %v264
  %282 = vmatpush.msra.mxu0 %v263
  %283 = vmatpush.msra.mxu0 %v262
  %284 = vmatpush.msra.mxu0 %v261
  %285 = vmatpush.msra.mxu0 %v260
  %286 = vmatpush.msra.mxu0 %v259
  %287 = vmatpush.msra.mxu0 %v258
  %288 = vmatmul.f32.gmra.mxu0 %v65
  %v289 = vpop.f32.mrf.mxu0
  %v290 = vadd.f32 0.0, %v289
  %291 = vmatmul.f32.gmra.mxu0 %v68
  %v292 = vpop.f32.mrf.mxu0
  %v293 = vadd.f32 0.0, %v292
  %294 = vmatmul.f32.gmra.mxu0 %v71
  %v295 = vpop.f32.mrf.mxu0
  %v296 = vadd.f32 0.0, %v295
  %297 = vmatmul.f32.gmra.mxu0 %v74
  %v298 = vpop.f32.mrf.mxu0
  %v299 = vadd.f32 0.0, %v298
  %300 = vmatmul.f32.gmra.mxu0 %v77
  %v301 = vpop.f32.mrf.mxu0
  %v302 = vadd.f32 0.0, %v301
  %303 = vmatmul.f32.gmra.mxu0 %v80
  %v304 = vpop.f32.mrf.mxu0
  %v305 = vadd.f32 0.0, %v304
  %306 = vmatmul.f32.gmra.mxu0 %v83
  %v307 = vpop.f32.mrf.mxu0
  %v308 = vadd.f32 0.0, %v307
  %309 = vmatmul.f32.gmra.mxu0 %v86
  %v310 = vpop.f32.mrf.mxu0
  %v311 = vadd.f32 0.0, %v310
  %312 = vdwg.mxu0
  %v313 = vmax.f32 %v249, %v290
  %v314 = vmax.f32 %v250, %v293
  %v315 = vmax.f32 %v251, %v296
  %v316 = vmax.f32 %v252, %v299
  %v317 = vmax.f32 %v253, %v302
  %v318 = vmax.f32 %v254, %v305
  %v319 = vmax.f32 %v255, %v308
  %v320 = vmax.f32 %v256, %v311
  %v321 = vld [vmem:[%s3] sm:$0x1]
  %v323 = vperm.slane %v321, 0
  %v325 = vadd.f32 %v313, %v323
  %v326 = vadd.f32 %v314, %v323
  %v327 = vadd.f32 %v315, %v323
  %v328 = vadd.f32 %v316, %v323
  %v329 = vadd.f32 %v317, %v323
  %v330 = vadd.f32 %v318, %v323
  %v331 = vadd.f32 %v319, %v323
  %v332 = vadd.f32 %v320, %v323
  %v333 = vmax.f32 %v325, 0.0
  %v334 = vmax.f32 %v326, 0.0
  %v335 = vmax.f32 %v327, 0.0
  %v336 = vmax.f32 %v328, 0.0
  %v337 = vmax.f32 %v329, 0.0
  %v338 = vmax.f32 %v330, 0.0
  %v339 = vmax.f32 %v331, 0.0
  %v340 = vmax.f32 %v332, 0.0
  %v341 = vld [vmem:[%s1] sm:$0xff]
  %v342 = vld [vmem:[%s1 + $0x8] sm:$0xff]
  %v343 = vld [vmem:[%s1 + $0x10] sm:$0xff]
  %v344 = vld [vmem:[%s1 + $0x18] sm:$0xff]
  %v345 = vld [vmem:[%s1 + $0x20] sm:$0xff]
  %v346 = vld [vmem:[%s1 + $0x28] sm:$0xff]
  %v347 = vld [vmem:[%s1 + $0x30] sm:$0xff]
  %v348 = vld [vmem:[%s1 + $0x38] sm:$0xff]
  %v350 = vsel %vm63, %v341, 0
  %v353 = vsel %vm63, %v342, 0
  %v356 = vsel %vm63, %v343, 0
  %v359 = vsel %vm63, %v344, 0
  %v362 = vsel %vm63, %v345, 0
  %v365 = vsel %vm63, %v346, 0
  %v368 = vsel %vm63, %v347, 0
  %v371 = vsel %vm63, %v348, 0
  %373 = vmatpush.msra.mxu0 0.0
  %374 = vmatpush.msra.mxu0 0.0
  %375 = vmatpush.msra.mxu0 %v62
  %376 = vmatpush.msra.mxu0 %v61
  %377 = vmatpush.msra.mxu0 %v60
  %378 = vmatpush.msra.mxu0 %v59
  %379 = vmatpush.msra.mxu0 %v58
  %380 = vmatpush.msra.mxu0 %v57
  %381 = vmatpush.msra.mxu0 %v56
  %382 = vmatpush.msra.mxu0 %v55
  %383 = vmatpush.msra.mxu0 %v54
  %384 = vmatpush.msra.mxu0 %v53
  %385 = vmatpush.msra.mxu0 %v52
  %386 = vmatpush.msra.mxu0 %v51
  %387 = vmatpush.msra.mxu0 %v50
  %388 = vmatpush.msra.mxu0 %v49
  %389 = vmatmul.f32.gmra.mxu0 %v350
  %v390 = vpop.f32.mrf.mxu0
  %v391 = vadd.f32 0.0, %v390
  %392 = vmatmul.f32.gmra.mxu0 %v353
  %v393 = vpop.f32.mrf.mxu0
  %v394 = vadd.f32 0.0, %v393
  %395 = vmatmul.f32.gmra.mxu0 %v356
  %v396 = vpop.f32.mrf.mxu0
  %v397 = vadd.f32 0.0, %v396
  %398 = vmatmul.f32.gmra.mxu0 %v359
  %v399 = vpop.f32.mrf.mxu0
  %v400 = vadd.f32 0.0, %v399
  %401 = vmatmul.f32.gmra.mxu0 %v362
  %v402 = vpop.f32.mrf.mxu0
  %v403 = vadd.f32 0.0, %v402
  %404 = vmatmul.f32.gmra.mxu0 %v365
  %v405 = vpop.f32.mrf.mxu0
  %v406 = vadd.f32 0.0, %v405
  %407 = vmatmul.f32.gmra.mxu0 %v368
  %v408 = vpop.f32.mrf.mxu0
  %v409 = vadd.f32 0.0, %v408
  %410 = vmatmul.f32.gmra.mxu0 %v371
  %v411 = vpop.f32.mrf.mxu0
  %v412 = vadd.f32 0.0, %v411
  %413 = vdwg.mxu0
  %414 = vmatpush.msra.mxu0 0.0
  %415 = vmatpush.msra.mxu0 0.0
  %416 = vmatpush.msra.mxu0 %v143
  %417 = vmatpush.msra.mxu0 %v142
  %418 = vmatpush.msra.mxu0 %v141
  %419 = vmatpush.msra.mxu0 %v140
  %420 = vmatpush.msra.mxu0 %v139
  %421 = vmatpush.msra.mxu0 %v138
  %422 = vmatpush.msra.mxu0 %v137
  %423 = vmatpush.msra.mxu0 %v136
  %424 = vmatpush.msra.mxu0 %v135
  %425 = vmatpush.msra.mxu0 %v134
  %426 = vmatpush.msra.mxu0 %v133
  %427 = vmatpush.msra.mxu0 %v132
  %428 = vmatpush.msra.mxu0 %v131
  %429 = vmatpush.msra.mxu0 %v130
  %430 = vmatmul.f32.gmra.mxu0 %v350
  %v431 = vpop.f32.mrf.mxu0
  %v432 = vadd.f32 0.0, %v431
  %433 = vmatmul.f32.gmra.mxu0 %v353
  %v434 = vpop.f32.mrf.mxu0
  %v435 = vadd.f32 0.0, %v434
  %436 = vmatmul.f32.gmra.mxu0 %v356
  %v437 = vpop.f32.mrf.mxu0
  %v438 = vadd.f32 0.0, %v437
  %439 = vmatmul.f32.gmra.mxu0 %v359
  %v440 = vpop.f32.mrf.mxu0
  %v441 = vadd.f32 0.0, %v440
  %442 = vmatmul.f32.gmra.mxu0 %v362
  %v443 = vpop.f32.mrf.mxu0
  %v444 = vadd.f32 0.0, %v443
  %445 = vmatmul.f32.gmra.mxu0 %v365
  %v446 = vpop.f32.mrf.mxu0
  %v447 = vadd.f32 0.0, %v446
  %448 = vmatmul.f32.gmra.mxu0 %v368
  %v449 = vpop.f32.mrf.mxu0
  %v450 = vadd.f32 0.0, %v449
  %451 = vmatmul.f32.gmra.mxu0 %v371
  %v452 = vpop.f32.mrf.mxu0
  %v453 = vadd.f32 0.0, %v452
  %454 = vdwg.mxu0
  %v455 = vmax.f32 %v391, %v432
  %v456 = vmax.f32 %v394, %v435
  %v457 = vmax.f32 %v397, %v438
  %v458 = vmax.f32 %v400, %v441
  %v459 = vmax.f32 %v403, %v444
  %v460 = vmax.f32 %v406, %v447
  %v461 = vmax.f32 %v409, %v450
  %v462 = vmax.f32 %v412, %v453
  %463 = vmatpush.msra.mxu0 0.0
  %464 = vmatpush.msra.mxu0 0.0
  %465 = vmatpush.msra.mxu0 %v207
  %466 = vmatpush.msra.mxu0 %v206
  %467 = vmatpush.msra.mxu0 %v205
  %468 = vmatpush.msra.mxu0 %v204
  %469 = vmatpush.msra.mxu0 %v203
  %470 = vmatpush.msra.mxu0 %v202
  %471 = vmatpush.msra.mxu0 %v201
  %472 = vmatpush.msra.mxu0 %v200
  %473 = vmatpush.msra.mxu0 %v199
  %474 = vmatpush.msra.mxu0 %v198
  %475 = vmatpush.msra.mxu0 %v197
  %476 = vmatpush.msra.mxu0 %v196
  %477 = vmatpush.msra.mxu0 %v195
  %478 = vmatpush.msra.mxu0 %v194
  %479 = vmatmul.f32.gmra.mxu0 %v350
  %v480 = vpop.f32.mrf.mxu0
  %v481 = vadd.f32 0.0, %v480
  %482 = vmatmul.f32.gmra.mxu0 %v353
  %v483 = vpop.f32.mrf.mxu0
  %v484 = vadd.f32 0.0, %v483
  %485 = vmatmul.f32.gmra.mxu0 %v356
  %v486 = vpop.f32.mrf.mxu0
  %v487 = vadd.f32 0.0, %v486
  %488 = vmatmul.f32.gmra.mxu0 %v359
  %v489 = vpop.f32.mrf.mxu0
  %v490 = vadd.f32 0.0, %v489
  %491 = vmatmul.f32.gmra.mxu0 %v362
  %v492 = vpop.f32.mrf.mxu0
  %v493 = vadd.f32 0.0, %v492
  %494 = vmatmul.f32.gmra.mxu0 %v365
  %v495 = vpop.f32.mrf.mxu0
  %v496 = vadd.f32 0.0, %v495
  %497 = vmatmul.f32.gmra.mxu0 %v368
  %v498 = vpop.f32.mrf.mxu0
  %v499 = vadd.f32 0.0, %v498
  %500 = vmatmul.f32.gmra.mxu0 %v371
  %v501 = vpop.f32.mrf.mxu0
  %v502 = vadd.f32 0.0, %v501
  %503 = vdwg.mxu0
  %v504 = vmax.f32 %v455, %v481
  %v505 = vmax.f32 %v456, %v484
  %v506 = vmax.f32 %v457, %v487
  %v507 = vmax.f32 %v458, %v490
  %v508 = vmax.f32 %v459, %v493
  %v509 = vmax.f32 %v460, %v496
  %v510 = vmax.f32 %v461, %v499
  %v511 = vmax.f32 %v462, %v502
  %512 = vmatpush.msra.mxu0 0.0
  %513 = vmatpush.msra.mxu0 0.0
  %514 = vmatpush.msra.mxu0 %v271
  %515 = vmatpush.msra.mxu0 %v270
  %516 = vmatpush.msra.mxu0 %v269
  %517 = vmatpush.msra.mxu0 %v268
  %518 = vmatpush.msra.mxu0 %v267
  %519 = vmatpush.msra.mxu0 %v266
  %520 = vmatpush.msra.mxu0 %v265
  %521 = vmatpush.msra.mxu0 %v264
  %522 = vmatpush.msra.mxu0 %v263
  %523 = vmatpush.msra.mxu0 %v262
  %524 = vmatpush.msra.mxu0 %v261
  %525 = vmatpush.msra.mxu0 %v260
  %526 = vmatpush.msra.mxu0 %v259
  %527 = vmatpush.msra.mxu0 %v258
  %528 = vmatmul.f32.gmra.mxu0 %v350
  %v529 = vpop.f32.mrf.mxu0
  %v530 = vadd.f32 0.0, %v529
  %531 = vmatmul.f32.gmra.mxu0 %v353
  %v532 = vpop.f32.mrf.mxu0
  %v533 = vadd.f32 0.0, %v532
  %534 = vmatmul.f32.gmra.mxu0 %v356
  %v535 = vpop.f32.mrf.mxu0
  %v536 = vadd.f32 0.0, %v535
  %537 = vmatmul.f32.gmra.mxu0 %v359
  %v538 = vpop.f32.mrf.mxu0
  %v539 = vadd.f32 0.0, %v538
  %540 = vmatmul.f32.gmra.mxu0 %v362
  %v541 = vpop.f32.mrf.mxu0
  %v542 = vadd.f32 0.0, %v541
  %543 = vmatmul.f32.gmra.mxu0 %v365
  %v544 = vpop.f32.mrf.mxu0
  %v545 = vadd.f32 0.0, %v544
  %546 = vmatmul.f32.gmra.mxu0 %v368
  %v547 = vpop.f32.mrf.mxu0
  %v548 = vadd.f32 0.0, %v547
  %549 = vmatmul.f32.gmra.mxu0 %v371
  %v550 = vpop.f32.mrf.mxu0
  %v551 = vadd.f32 0.0, %v550
  %552 = vdwg.mxu0
  %v553 = vmax.f32 %v504, %v530
  %v554 = vmax.f32 %v505, %v533
  %v555 = vmax.f32 %v506, %v536
  %v556 = vmax.f32 %v507, %v539
  %v557 = vmax.f32 %v508, %v542
  %v558 = vmax.f32 %v509, %v545
  %v559 = vmax.f32 %v510, %v548
  %v560 = vmax.f32 %v511, %v551
  %v561 = vadd.f32 %v553, %v323
  %v562 = vadd.f32 %v554, %v323
  %v563 = vadd.f32 %v555, %v323
  %v564 = vadd.f32 %v556, %v323
  %v565 = vadd.f32 %v557, %v323
  %v566 = vadd.f32 %v558, %v323
  %v567 = vadd.f32 %v559, %v323
  %v568 = vadd.f32 %v560, %v323
  %v569 = vmax.f32 %v561, 0.0
  %v570 = vmax.f32 %v562, 0.0
  %v571 = vmax.f32 %v563, 0.0
  %v572 = vmax.f32 %v564, 0.0
  %v573 = vmax.f32 %v565, 0.0
  %v574 = vmax.f32 %v566, 0.0
  %v575 = vmax.f32 %v567, 0.0
  %v576 = vmax.f32 %v568, 0.0
  %v577 = vld [vmem:[%s4] sm:$0xff]
  %v578 = vld [vmem:[%s4 + $0x8] sm:$0xff]
  %v579 = vld [vmem:[%s4 + $0x10] sm:$0xff]
  %v580 = vld [vmem:[%s4 + $0x18] sm:$0xff]
  %v581 = vld [vmem:[%s4 + $0x20] sm:$0xff]
  %v582 = vld [vmem:[%s4 + $0x28] sm:$0xff]
  %v583 = vld [vmem:[%s4 + $0x30] sm:$0xff]
  %v584 = vld [vmem:[%s4 + $0x38] sm:$0xff]
  %v585 = vld [vmem:[%s4 + $0x40] sm:$0xff]
  %v586 = vld [vmem:[%s4 + $0x48] sm:$0x3f]
  %s587 = scalar_lea.vmem %s4, 80
  %v588 = vld [vmem:[%s587] sm:$0xff]
  %v589 = vld [vmem:[%s587 + $0x8] sm:$0xff]
  %v590 = vld [vmem:[%s587 + $0x10] sm:$0xff]
  %v591 = vld [vmem:[%s587 + $0x18] sm:$0xff]
  %v592 = vld [vmem:[%s587 + $0x20] sm:$0xff]
  %v593 = vld [vmem:[%s587 + $0x28] sm:$0xff]
  %v594 = vld [vmem:[%s587 + $0x30] sm:$0xff]
  %v595 = vld [vmem:[%s587 + $0x38] sm:$0xff]
  %v596 = vld [vmem:[%s587 + $0x40] sm:$0xff]
  %v597 = vld [vmem:[%s587 + $0x48] sm:$0x3f]
  %vm598 = vcmask 637952
  %v600 = vsel %vm598, %v569, 0
  %v603 = vsel %vm598, %v570, 0
  %v606 = vsel %vm598, %v571, 0
  %v609 = vsel %vm598, %v572, 0
  %v612 = vsel %vm598, %v573, 0
  %v615 = vsel %vm598, %v574, 0
  %v618 = vsel %vm598, %v575, 0
  %v621 = vsel %vm598, %v576, 0
  %vm623 = vcmask 1045504
  %v625 = vsel %vm623, %v597, 0
  %627 = vmatpush.msra.mxu0 0.0
  %628 = vmatpush.msra.mxu0 0.0
  %629 = vmatpush.msra.mxu0 0.0
  %630 = vmatpush.msra.mxu0 0.0
  %631 = vmatpush.msra.mxu0 0.0
  %632 = vmatpush.msra.mxu0 0.0
  %633 = vmatpush.msra.mxu0 %v625
  %634 = vmatpush.msra.mxu0 %v596
  %635 = vmatpush.msra.mxu0 %v595
  %636 = vmatpush.msra.mxu0 %v594
  %637 = vmatpush.msra.mxu0 %v593
  %638 = vmatpush.msra.mxu0 %v592
  %639 = vmatpush.msra.mxu0 %v591
  %640 = vmatpush.msra.mxu0 %v590
  %641 = vmatpush.msra.mxu0 %v589
  %642 = vmatpush.msra.mxu0 %v588
  %643 = vmatmul.f32.gmra.mxu0 %v600
  %v644 = vpop.f32.mrf.mxu0
  %v645 = vadd.f32 0.0, %v644
  %646 = vmatmul.f32.gmra.mxu0 %v603
  %v647 = vpop.f32.mrf.mxu0
  %v648 = vadd.f32 0.0, %v647
  %649 = vmatmul.f32.gmra.mxu0 %v606
  %v650 = vpop.f32.mrf.mxu0
  %v651 = vadd.f32 0.0, %v650
  %652 = vmatmul.f32.gmra.mxu0 %v609
  %v653 = vpop.f32.mrf.mxu0
  %v654 = vadd.f32 0.0, %v653
  %655 = vmatmul.f32.gmra.mxu0 %v612
  %v656 = vpop.f32.mrf.mxu0
  %v657 = vadd.f32 0.0, %v656
  %658 = vmatmul.f32.gmra.mxu0 %v615
  %v659 = vpop.f32.mrf.mxu0
  %v660 = vadd.f32 0.0, %v659
  %661 = vmatmul.f32.gmra.mxu0 %v618
  %v662 = vpop.f32.mrf.mxu0
  %v663 = vadd.f32 0.0, %v662
  %664 = vmatmul.f32.gmra.mxu0 %v621
  %v665 = vpop.f32.mrf.mxu0
  %v666 = vadd.f32 0.0, %v665
  %667 = vdwg.mxu0
  %v669 = vsel %vm598, %v333, 0
  %v672 = vsel %vm598, %v334, 0
  %v675 = vsel %vm598, %v335, 0
  %v678 = vsel %vm598, %v336, 0
  %v681 = vsel %vm598, %v337, 0
  %v684 = vsel %vm598, %v338, 0
  %v687 = vsel %vm598, %v339, 0
  %v690 = vsel %vm598, %v340, 0
  %v693 = vsel %vm623, %v586, 0
  %695 = vmatpush.msra.mxu0 0.0
  %696 = vmatpush.msra.mxu0 0.0
  %697 = vmatpush.msra.mxu0 0.0
  %698 = vmatpush.msra.mxu0 0.0
  %699 = vmatpush.msra.mxu0 0.0
  %700 = vmatpush.msra.mxu0 0.0
  %701 = vmatpush.msra.mxu0 %v693
  %702 = vmatpush.msra.mxu0 %v585
  %703 = vmatpush.msra.mxu0 %v584
  %704 = vmatpush.msra.mxu0 %v583
  %705 = vmatpush.msra.mxu0 %v582
  %706 = vmatpush.msra.mxu0 %v581
  %707 = vmatpush.msra.mxu0 %v580
  %708 = vmatpush.msra.mxu0 %v579
  %709 = vmatpush.msra.mxu0 %v578
  %710 = vmatpush.msra.mxu0 %v577
  %711 = vmatmul.f32.gmra.mxu0 %v669
  %v712 = vpop.f32.mrf.mxu0
  %v713 = vadd.f32 %v645, %v712
  %714 = vmatmul.f32.gmra.mxu0 %v672
  %v715 = vpop.f32.mrf.mxu0
  %v716 = vadd.f32 %v648, %v715
  %717 = vmatmul.f32.gmra.mxu0 %v675
  %v718 = vpop.f32.mrf.mxu0
  %v719 = vadd.f32 %v651, %v718
  %720 = vmatmul.f32.gmra.mxu0 %v678
  %v721 = vpop.f32.mrf.mxu0
  %v722 = vadd.f32 %v654, %v721
  %723 = vmatmul.f32.gmra.mxu0 %v681
  %v724 = vpop.f32.mrf.mxu0
  %v725 = vadd.f32 %v657, %v724
  %726 = vmatmul.f32.gmra.mxu0 %v684
  %v727 = vpop.f32.mrf.mxu0
  %v728 = vadd.f32 %v660, %v727
  %729 = vmatmul.f32.gmra.mxu0 %v687
  %v730 = vpop.f32.mrf.mxu0
  %v731 = vadd.f32 %v663, %v730
  %732 = vmatmul.f32.gmra.mxu0 %v690
  %v733 = vpop.f32.mrf.mxu0
  %v734 = vadd.f32 %v666, %v733
  %735 = vdwg.mxu0
  %s736 = scalar_lea.vmem %s4, 160
  %v737 = vld [vmem:[%s736] sm:$0xff]
  %v738 = vld [vmem:[%s736 + $0x8] sm:$0xff]
  %v739 = vld [vmem:[%s736 + $0x10] sm:$0xff]
  %v740 = vld [vmem:[%s736 + $0x18] sm:$0xff]
  %v741 = vld [vmem:[%s736 + $0x20] sm:$0xff]
  %v742 = vld [vmem:[%s736 + $0x28] sm:$0xff]
  %v743 = vld [vmem:[%s736 + $0x30] sm:$0xff]
  %v744 = vld [vmem:[%s736 + $0x38] sm:$0xff]
  %v745 = vld [vmem:[%s736 + $0x40] sm:$0xff]
  %v746 = vld [vmem:[%s736 + $0x48] sm:$0x3f]
  %vm748 = vcmask 1046528
  %v749 = vrot.slane %v333, 1
  %v750 = vrot.slane %v334, 1
  %v751 = vsel %vm748, %v749, %v750
  %v752 = vrot.slane %v335, 1
  %v753 = vsel %vm748, %v750, %v752
  %v754 = vrot.slane %v336, 1
  %v755 = vsel %vm748, %v752, %v754
  %v756 = vrot.slane %v337, 1
  %v757 = vsel %vm748, %v754, %v756
  %v758 = vrot.slane %v338, 1
  %v759 = vsel %vm748, %v756, %v758
  %v760 = vrot.slane %v339, 1
  %v761 = vsel %vm748, %v758, %v760
  %v762 = vrot.slane %v340, 1
  %v763 = vsel %vm748, %v760, %v762
  %v764 = vrot.slane 0.0, 1
  %v765 = vsel %vm748, %v762, %v764
  %v766 = vsel %vm598, %v751, 0
  %v768 = vsel %vm598, %v753, 0
  %v770 = vsel %vm598, %v755, 0
  %v772 = vsel %vm598, %v757, 0
  %v774 = vsel %vm598, %v759, 0
  %v776 = vsel %vm598, %v761, 0
  %v778 = vsel %vm598, %v763, 0
  %v780 = vsel %vm598, %v765, 0
  %v783 = vsel %vm623, %v746, 0
  %785 = vmatpush.msra.mxu0 0.0
  %786 = vmatpush.msra.mxu0 0.0
  %787 = vmatpush.msra.mxu0 0.0
  %788 = vmatpush.msra.mxu0 0.0
  %789 = vmatpush.msra.mxu0 0.0
  %790 = vmatpush.msra.mxu0 0.0
  %791 = vmatpush.msra.mxu0 %v783
  %792 = vmatpush.msra.mxu0 %v745
  %793 = vmatpush.msra.mxu0 %v744
  %794 = vmatpush.msra.mxu0 %v743
  %795 = vmatpush.msra.mxu0 %v742
  %796 = vmatpush.msra.mxu0 %v741
  %797 = vmatpush.msra.mxu0 %v740
  %798 = vmatpush.msra.mxu0 %v739
  %799 = vmatpush.msra.mxu0 %v738
  %800 = vmatpush.msra.mxu0 %v737
  %801 = vmatmul.f32.gmra.mxu0 %v766
  %v802 = vpop.f32.mrf.mxu0
  %v803 = vadd.f32 0.0, %v802
  %804 = vmatmul.f32.gmra.mxu0 %v768
  %v805 = vpop.f32.mrf.mxu0
  %v806 = vadd.f32 0.0, %v805
  %807 = vmatmul.f32.gmra.mxu0 %v770
  %v808 = vpop.f32.mrf.mxu0
  %v809 = vadd.f32 0.0, %v808
  %810 = vmatmul.f32.gmra.mxu0 %v772
  %v811 = vpop.f32.mrf.mxu0
  %v812 = vadd.f32 0.0, %v811
  %813 = vmatmul.f32.gmra.mxu0 %v774
  %v814 = vpop.f32.mrf.mxu0
  %v815 = vadd.f32 0.0, %v814
  %816 = vmatmul.f32.gmra.mxu0 %v776
  %v817 = vpop.f32.mrf.mxu0
  %v818 = vadd.f32 0.0, %v817
  %819 = vmatmul.f32.gmra.mxu0 %v778
  %v820 = vpop.f32.mrf.mxu0
  %v821 = vadd.f32 0.0, %v820
  %822 = vmatmul.f32.gmra.mxu0 %v780
  %v823 = vpop.f32.mrf.mxu0
  %v824 = vadd.f32 0.0, %v823
  %825 = vdwg.mxu0
  %v826 = vadd.f32 %v713, %v803
  %v827 = vadd.f32 %v716, %v806
  %v828 = vadd.f32 %v719, %v809
  %v829 = vadd.f32 %v722, %v812
  %v830 = vadd.f32 %v725, %v815
  %v831 = vadd.f32 %v728, %v818
  %v832 = vadd.f32 %v731, %v821
  %v833 = vadd.f32 %v734, %v824
  %834 = vmatpush.msra.mxu0 0.0
  %835 = vmatpush.msra.mxu0 0.0
  %836 = vmatpush.msra.mxu0 0.0
  %837 = vmatpush.msra.mxu0 0.0
  %838 = vmatpush.msra.mxu0 0.0
  %839 = vmatpush.msra.mxu0 0.0
  %840 = vmatpush.msra.mxu0 %v625
  %841 = vmatpush.msra.mxu0 %v596
  %842 = vmatpush.msra.mxu0 %v595
  %843 = vmatpush.msra.mxu0 %v594
  %844 = vmatpush.msra.mxu0 %v593
  %845 = vmatpush.msra.mxu0 %v592
  %846 = vmatpush.msra.mxu0 %v591
  %847 = vmatpush.msra.mxu0 %v590
  %848 = vmatpush.msra.mxu0 %v589
  %849 = vmatpush.msra.mxu0 %v588
  %850 = vmatmul.f32.gmra.mxu0 %v766
  %v851 = vpop.f32.mrf.mxu0
  %v852 = vadd.f32 0.0, %v851
  %853 = vmatmul.f32.gmra.mxu0 %v768
  %v854 = vpop.f32.mrf.mxu0
  %v855 = vadd.f32 0.0, %v854
  %856 = vmatmul.f32.gmra.mxu0 %v770
  %v857 = vpop.f32.mrf.mxu0
  %v858 = vadd.f32 0.0, %v857
  %859 = vmatmul.f32.gmra.mxu0 %v772
  %v860 = vpop.f32.mrf.mxu0
  %v861 = vadd.f32 0.0, %v860
  %862 = vmatmul.f32.gmra.mxu0 %v774
  %v863 = vpop.f32.mrf.mxu0
  %v864 = vadd.f32 0.0, %v863
  %865 = vmatmul.f32.gmra.mxu0 %v776
  %v866 = vpop.f32.mrf.mxu0
  %v867 = vadd.f32 0.0, %v866
  %868 = vmatmul.f32.gmra.mxu0 %v778
  %v869 = vpop.f32.mrf.mxu0
  %v870 = vadd.f32 0.0, %v869
  %871 = vmatmul.f32.gmra.mxu0 %v780
  %v872 = vpop.f32.mrf.mxu0
  %v873 = vadd.f32 0.0, %v872
  %874 = vdwg.mxu0
  %875 = vmatpush.msra.mxu0 0.0
  %876 = vmatpush.msra.mxu0 0.0
  %877 = vmatpush.msra.mxu0 0.0
  %878 = vmatpush.msra.mxu0 0.0
  %879 = vmatpush.msra.mxu0 0.0
  %880 = vmatpush.msra.mxu0 0.0
  %881 = vmatpush.msra.mxu0 %v693
  %882 = vmatpush.msra.mxu0 %v585
  %883 = vmatpush.msra.mxu0 %v584
  %884 = vmatpush.msra.mxu0 %v583
  %885 = vmatpush.msra.mxu0 %v582
  %886 = vmatpush.msra.mxu0 %v581
  %887 = vmatpush.msra.mxu0 %v580
  %888 = vmatpush.msra.mxu0 %v579
  %889 = vmatpush.msra.mxu0 %v578
  %890 = vmatpush.msra.mxu0 %v577
  %891 = vmatmul.f32.gmra.mxu0 %v600
  %v892 = vpop.f32.mrf.mxu0
  %v893 = vadd.f32 %v852, %v892
  %894 = vmatmul.f32.gmra.mxu0 %v603
  %v895 = vpop.f32.mrf.mxu0
  %v896 = vadd.f32 %v855, %v895
  %897 = vmatmul.f32.gmra.mxu0 %v606
  %v898 = vpop.f32.mrf.mxu0
  %v899 = vadd.f32 %v858, %v898
  %900 = vmatmul.f32.gmra.mxu0 %v609
  %v901 = vpop.f32.mrf.mxu0
  %v902 = vadd.f32 %v861, %v901
  %903 = vmatmul.f32.gmra.mxu0 %v612
  %v904 = vpop.f32.mrf.mxu0
  %v905 = vadd.f32 %v864, %v904
  %906 = vmatmul.f32.gmra.mxu0 %v615
  %v907 = vpop.f32.mrf.mxu0
  %v908 = vadd.f32 %v867, %v907
  %909 = vmatmul.f32.gmra.mxu0 %v618
  %v910 = vpop.f32.mrf.mxu0
  %v911 = vadd.f32 %v870, %v910
  %912 = vmatmul.f32.gmra.mxu0 %v621
  %v913 = vpop.f32.mrf.mxu0
  %v914 = vadd.f32 %v873, %v913
  %915 = vdwg.mxu0
  %v916 = vrot.slane %v569, 1
  %v917 = vrot.slane %v570, 1
  %v918 = vsel %vm748, %v916, %v917
  %v919 = vrot.slane %v571, 1
  %v920 = vsel %vm748, %v917, %v919
  %v921 = vrot.slane %v572, 1
  %v922 = vsel %vm748, %v919, %v921
  %v923 = vrot.slane %v573, 1
  %v924 = vsel %vm748, %v921, %v923
  %v925 = vrot.slane %v574, 1
  %v926 = vsel %vm748, %v923, %v925
  %v927 = vrot.slane %v575, 1
  %v928 = vsel %vm748, %v925, %v927
  %v929 = vrot.slane %v576, 1
  %v930 = vsel %vm748, %v927, %v929
  %v931 = vsel %vm748, %v929, %v764
  %v932 = vsel %vm598, %v918, 0
  %v934 = vsel %vm598, %v920, 0
  %v936 = vsel %vm598, %v922, 0
  %v938 = vsel %vm598, %v924, 0
  %v940 = vsel %vm598, %v926, 0
  %v942 = vsel %vm598, %v928, 0
  %v944 = vsel %vm598, %v930, 0
  %v946 = vsel %vm598, %v931, 0
  %948 = vmatpush.msra.mxu0 0.0
  %949 = vmatpush.msra.mxu0 0.0
  %950 = vmatpush.msra.mxu0 0.0
  %951 = vmatpush.msra.mxu0 0.0
  %952 = vmatpush.msra.mxu0 0.0
  %953 = vmatpush.msra.mxu0 0.0
  %954 = vmatpush.msra.mxu0 %v783
  %955 = vmatpush.msra.mxu0 %v745
  %956 = vmatpush.msra.mxu0 %v744
  %957 = vmatpush.msra.mxu0 %v743
  %958 = vmatpush.msra.mxu0 %v742
  %959 = vmatpush.msra.mxu0 %v741
  %960 = vmatpush.msra.mxu0 %v740
  %961 = vmatpush.msra.mxu0 %v739
  %962 = vmatpush.msra.mxu0 %v738
  %963 = vmatpush.msra.mxu0 %v737
  %964 = vmatmul.f32.gmra.mxu0 %v932
  %v965 = vpop.f32.mrf.mxu0
  %v966 = vadd.f32 0.0, %v965
  %967 = vmatmul.f32.gmra.mxu0 %v934
  %v968 = vpop.f32.mrf.mxu0
  %v969 = vadd.f32 0.0, %v968
  %970 = vmatmul.f32.gmra.mxu0 %v936
  %v971 = vpop.f32.mrf.mxu0
  %v972 = vadd.f32 0.0, %v971
  %973 = vmatmul.f32.gmra.mxu0 %v938
  %v974 = vpop.f32.mrf.mxu0
  %v975 = vadd.f32 0.0, %v974
  %976 = vmatmul.f32.gmra.mxu0 %v940
  %v977 = vpop.f32.mrf.mxu0
  %v978 = vadd.f32 0.0, %v977
  %979 = vmatmul.f32.gmra.mxu0 %v942
  %v980 = vpop.f32.mrf.mxu0
  %v981 = vadd.f32 0.0, %v980
  %982 = vmatmul.f32.gmra.mxu0 %v944
  %v983 = vpop.f32.mrf.mxu0
  %v984 = vadd.f32 0.0, %v983
  %985 = vmatmul.f32.gmra.mxu0 %v946
  %v986 = vpop.f32.mrf.mxu0
  %v987 = vadd.f32 0.0, %v986
  %988 = vdwg.mxu0
  %v989 = vadd.f32 %v893, %v966
  %v990 = vadd.f32 %v896, %v969
  %v991 = vadd.f32 %v899, %v972
  %v992 = vadd.f32 %v902, %v975
  %v993 = vadd.f32 %v905, %v978
  %v994 = vadd.f32 %v908, %v981
  %v995 = vadd.f32 %v911, %v984
  %v996 = vadd.f32 %v914, %v987
  %v997 = vmax.f32 %v826, %v989
  %v998 = vmax.f32 %v827, %v990
  %v999 = vmax.f32 %v828, %v991
  %v1000 = vmax.f32 %v829, %v992
  %v1001 = vmax.f32 %v830, %v993
  %v1002 = vmax.f32 %v831, %v994
  %v1003 = vmax.f32 %v832, %v995
  %v1004 = vmax.f32 %v833, %v996
  %s1005 = scalar_lea.vmem %s4, 240
  %v1006 = vld [vmem:[%s1005] sm:$0xff]
  %v1007 = vld [vmem:[%s1005 + $0x8] sm:$0xff]
  %v1008 = vld [vmem:[%s1005 + $0x10] sm:$0xff]
  %v1009 = vld [vmem:[%s1005 + $0x18] sm:$0xff]
  %v1010 = vld [vmem:[%s1005 + $0x20] sm:$0xff]
  %v1011 = vld [vmem:[%s1005 + $0x28] sm:$0xff]
  %v1012 = vld [vmem:[%s1005 + $0x30] sm:$0xff]
  %v1013 = vld [vmem:[%s1005 + $0x38] sm:$0xff]
  %v1014 = vld [vmem:[%s1005 + $0x40] sm:$0xff]
  %v1015 = vld [vmem:[%s1005 + $0x48] sm:$0x3f]
  %s1016 = scalar_lea.vmem %s4, 320
  %v1017 = vld [vmem:[%s1016] sm:$0xff]
  %v1018 = vld [vmem:[%s1016 + $0x8] sm:$0xff]
  %v1019 = vld [vmem:[%s1016 + $0x10] sm:$0xff]
  %v1020 = vld [vmem:[%s1016 + $0x18] sm:$0xff]
  %v1021 = vld [vmem:[%s1016 + $0x20] sm:$0xff]
  %v1022 = vld [vmem:[%s1016 + $0x28] sm:$0xff]
  %v1023 = vld [vmem:[%s1016 + $0x30] sm:$0xff]
  %v1024 = vld [vmem:[%s1016 + $0x38] sm:$0xff]
  %v1025 = vld [vmem:[%s1016 + $0x40] sm:$0xff]
  %v1026 = vld [vmem:[%s1016 + $0x48] sm:$0x3f]
  %v1028 = vsel %vm623, %v1026, 0
  %1030 = vmatpush.msra.mxu0 0.0
  %1031 = vmatpush.msra.mxu0 0.0
  %1032 = vmatpush.msra.mxu0 0.0
  %1033 = vmatpush.msra.mxu0 0.0
  %1034 = vmatpush.msra.mxu0 0.0
  %1035 = vmatpush.msra.mxu0 0.0
  %1036 = vmatpush.msra.mxu0 %v1028
  %1037 = vmatpush.msra.mxu0 %v1025
  %1038 = vmatpush.msra.mxu0 %v1024
  %1039 = vmatpush.msra.mxu0 %v1023
  %1040 = vmatpush.msra.mxu0 %v1022
  %1041 = vmatpush.msra.mxu0 %v1021
  %1042 = vmatpush.msra.mxu0 %v1020
  %1043 = vmatpush.msra.mxu0 %v1019
  %1044 = vmatpush.msra.mxu0 %v1018
  %1045 = vmatpush.msra.mxu0 %v1017
  %1046 = vmatmul.f32.gmra.mxu0 %v600
  %v1047 = vpop.f32.mrf.mxu0
  %v1048 = vadd.f32 0.0, %v1047
  %1049 = vmatmul.f32.gmra.mxu0 %v603
  %v1050 = vpop.f32.mrf.mxu0
  %v1051 = vadd.f32 0.0, %v1050
  %1052 = vmatmul.f32.gmra.mxu0 %v606
  %v1053 = vpop.f32.mrf.mxu0
  %v1054 = vadd.f32 0.0, %v1053
  %1055 = vmatmul.f32.gmra.mxu0 %v609
  %v1056 = vpop.f32.mrf.mxu0
  %v1057 = vadd.f32 0.0, %v1056
  %1058 = vmatmul.f32.gmra.mxu0 %v612
  %v1059 = vpop.f32.mrf.mxu0
  %v1060 = vadd.f32 0.0, %v1059
  %1061 = vmatmul.f32.gmra.mxu0 %v615
  %v1062 = vpop.f32.mrf.mxu0
  %v1063 = vadd.f32 0.0, %v1062
  %1064 = vmatmul.f32.gmra.mxu0 %v618
  %v1065 = vpop.f32.mrf.mxu0
  %v1066 = vadd.f32 0.0, %v1065
  %1067 = vmatmul.f32.gmra.mxu0 %v621
  %v1068 = vpop.f32.mrf.mxu0
  %v1069 = vadd.f32 0.0, %v1068
  %1070 = vdwg.mxu0
  %v1072 = vsel %vm623, %v1015, 0
  %1074 = vmatpush.msra.mxu0 0.0
  %1075 = vmatpush.msra.mxu0 0.0
  %1076 = vmatpush.msra.mxu0 0.0
  %1077 = vmatpush.msra.mxu0 0.0
  %1078 = vmatpush.msra.mxu0 0.0
  %1079 = vmatpush.msra.mxu0 0.0
  %1080 = vmatpush.msra.mxu0 %v1072
  %1081 = vmatpush.msra.mxu0 %v1014
  %1082 = vmatpush.msra.mxu0 %v1013
  %1083 = vmatpush.msra.mxu0 %v1012
  %1084 = vmatpush.msra.mxu0 %v1011
  %1085 = vmatpush.msra.mxu0 %v1010
  %1086 = vmatpush.msra.mxu0 %v1009
  %1087 = vmatpush.msra.mxu0 %v1008
  %1088 = vmatpush.msra.mxu0 %v1007
  %1089 = vmatpush.msra.mxu0 %v1006
  %1090 = vmatmul.f32.gmra.mxu0 %v669
  %v1091 = vpop.f32.mrf.mxu0
  %v1092 = vadd.f32 %v1048, %v1091
  %1093 = vmatmul.f32.gmra.mxu0 %v672
  %v1094 = vpop.f32.mrf.mxu0
  %v1095 = vadd.f32 %v1051, %v1094
  %1096 = vmatmul.f32.gmra.mxu0 %v675
  %v1097 = vpop.f32.mrf.mxu0
  %v1098 = vadd.f32 %v1054, %v1097
  %1099 = vmatmul.f32.gmra.mxu0 %v678
  %v1100 = vpop.f32.mrf.mxu0
  %v1101 = vadd.f32 %v1057, %v1100
  %1102 = vmatmul.f32.gmra.mxu0 %v681
  %v1103 = vpop.f32.mrf.mxu0
  %v1104 = vadd.f32 %v1060, %v1103
  %1105 = vmatmul.f32.gmra.mxu0 %v684
  %v1106 = vpop.f32.mrf.mxu0
  %v1107 = vadd.f32 %v1063, %v1106
  %1108 = vmatmul.f32.gmra.mxu0 %v687
  %v1109 = vpop.f32.mrf.mxu0
  %v1110 = vadd.f32 %v1066, %v1109
  %1111 = vmatmul.f32.gmra.mxu0 %v690
  %v1112 = vpop.f32.mrf.mxu0
  %v1113 = vadd.f32 %v1069, %v1112
  %1114 = vdwg.mxu0
  %s1115 = scalar_lea.vmem %s4, 400
  %v1116 = vld [vmem:[%s1115] sm:$0xff]
  %v1117 = vld [vmem:[%s1115 + $0x8] sm:$0xff]
  %v1118 = vld [vmem:[%s1115 + $0x10] sm:$0xff]
  %v1119 = vld [vmem:[%s1115 + $0x18] sm:$0xff]
  %v1120 = vld [vmem:[%s1115 + $0x20] sm:$0xff]
  %v1121 = vld [vmem:[%s1115 + $0x28] sm:$0xff]
  %v1122 = vld [vmem:[%s1115 + $0x30] sm:$0xff]
  %v1123 = vld [vmem:[%s1115 + $0x38] sm:$0xff]
  %v1124 = vld [vmem:[%s1115 + $0x40] sm:$0xff]
  %v1125 = vld [vmem:[%s1115 + $0x48] sm:$0x3f]
  %v1127 = vsel %vm623, %v1125, 0
  %1129 = vmatpush.msra.mxu0 0.0
  %1130 = vmatpush.msra.mxu0 0.0
  %1131 = vmatpush.msra.mxu0 0.0
  %1132 = vmatpush.msra.mxu0 0.0
  %1133 = vmatpush.msra.mxu0 0.0
  %1134 = vmatpush.msra.mxu0 0.0
  %1135 = vmatpush.msra.mxu0 %v1127
  %1136 = vmatpush.msra.mxu0 %v1124
  %1137 = vmatpush.msra.mxu0 %v1123
  %1138 = vmatpush.msra.mxu0 %v1122
  %1139 = vmatpush.msra.mxu0 %v1121
  %1140 = vmatpush.msra.mxu0 %v1120
  %1141 = vmatpush.msra.mxu0 %v1119
  %1142 = vmatpush.msra.mxu0 %v1118
  %1143 = vmatpush.msra.mxu0 %v1117
  %1144 = vmatpush.msra.mxu0 %v1116
  %1145 = vmatmul.f32.gmra.mxu0 %v766
  %v1146 = vpop.f32.mrf.mxu0
  %v1147 = vadd.f32 0.0, %v1146
  %1148 = vmatmul.f32.gmra.mxu0 %v768
  %v1149 = vpop.f32.mrf.mxu0
  %v1150 = vadd.f32 0.0, %v1149
  %1151 = vmatmul.f32.gmra.mxu0 %v770
  %v1152 = vpop.f32.mrf.mxu0
  %v1153 = vadd.f32 0.0, %v1152
  %1154 = vmatmul.f32.gmra.mxu0 %v772
  %v1155 = vpop.f32.mrf.mxu0
  %v1156 = vadd.f32 0.0, %v1155
  %1157 = vmatmul.f32.gmra.mxu0 %v774
  %v1158 = vpop.f32.mrf.mxu0
  %v1159 = vadd.f32 0.0, %v1158
  %1160 = vmatmul.f32.gmra.mxu0 %v776
  %v1161 = vpop.f32.mrf.mxu0
  %v1162 = vadd.f32 0.0, %v1161
  %1163 = vmatmul.f32.gmra.mxu0 %v778
  %v1164 = vpop.f32.mrf.mxu0
  %v1165 = vadd.f32 0.0, %v1164
  %1166 = vmatmul.f32.gmra.mxu0 %v780
  %v1167 = vpop.f32.mrf.mxu0
  %v1168 = vadd.f32 0.0, %v1167
  %1169 = vdwg.mxu0
  %v1170 = vadd.f32 %v1092, %v1147
  %v1171 = vadd.f32 %v1095, %v1150
  %v1172 = vadd.f32 %v1098, %v1153
  %v1173 = vadd.f32 %v1101, %v1156
  %v1174 = vadd.f32 %v1104, %v1159
  %v1175 = vadd.f32 %v1107, %v1162
  %v1176 = vadd.f32 %v1110, %v1165
  %v1177 = vadd.f32 %v1113, %v1168
  %v1178 = vmax.f32 %v997, %v1170
  %v1179 = vmax.f32 %v998, %v1171
  %v1180 = vmax.f32 %v999, %v1172
  %v1181 = vmax.f32 %v1000, %v1173
  %v1182 = vmax.f32 %v1001, %v1174
  %v1183 = vmax.f32 %v1002, %v1175
  %v1184 = vmax.f32 %v1003, %v1176
  %v1185 = vmax.f32 %v1004, %v1177
  %1186 = vmatpush.msra.mxu0 0.0
  %1187 = vmatpush.msra.mxu0 0.0
  %1188 = vmatpush.msra.mxu0 0.0
  %1189 = vmatpush.msra.mxu0 0.0
  %1190 = vmatpush.msra.mxu0 0.0
  %1191 = vmatpush.msra.mxu0 0.0
  %1192 = vmatpush.msra.mxu0 %v1028
  %1193 = vmatpush.msra.mxu0 %v1025
  %1194 = vmatpush.msra.mxu0 %v1024
  %1195 = vmatpush.msra.mxu0 %v1023
  %1196 = vmatpush.msra.mxu0 %v1022
  %1197 = vmatpush.msra.mxu0 %v1021
  %1198 = vmatpush.msra.mxu0 %v1020
  %1199 = vmatpush.msra.mxu0 %v1019
  %1200 = vmatpush.msra.mxu0 %v1018
  %1201 = vmatpush.msra.mxu0 %v1017
  %1202 = vmatmul.f32.gmra.mxu0 %v766
  %v1203 = vpop.f32.mrf.mxu0
  %v1204 = vadd.f32 0.0, %v1203
  %1205 = vmatmul.f32.gmra.mxu0 %v768
  %v1206 = vpop.f32.mrf.mxu0
  %v1207 = vadd.f32 0.0, %v1206
  %1208 = vmatmul.f32.gmra.mxu0 %v770
  %v1209 = vpop.f32.mrf.mxu0
  %v1210 = vadd.f32 0.0, %v1209
  %1211 = vmatmul.f32.gmra.mxu0 %v772
  %v1212 = vpop.f32.mrf.mxu0
  %v1213 = vadd.f32 0.0, %v1212
  %1214 = vmatmul.f32.gmra.mxu0 %v774
  %v1215 = vpop.f32.mrf.mxu0
  %v1216 = vadd.f32 0.0, %v1215
  %1217 = vmatmul.f32.gmra.mxu0 %v776
  %v1218 = vpop.f32.mrf.mxu0
  %v1219 = vadd.f32 0.0, %v1218
  %1220 = vmatmul.f32.gmra.mxu0 %v778
  %v1221 = vpop.f32.mrf.mxu0
  %v1222 = vadd.f32 0.0, %v1221
  %1223 = vmatmul.f32.gmra.mxu0 %v780
  %v1224 = vpop.f32.mrf.mxu0
  %v1225 = vadd.f32 0.0, %v1224
  %1226 = vdwg.mxu0
  %1227 = vmatpush.msra.mxu0 0.0
  %1228 = vmatpush.msra.mxu0 0.0
  %1229 = vmatpush.msra.mxu0 0.0
  %1230 = vmatpush.msra.mxu0 0.0
  %1231 = vmatpush.msra.mxu0 0.0
  %1232 = vmatpush.msra.mxu0 0.0
  %1233 = vmatpush.msra.mxu0 %v1072
  %1234 = vmatpush.msra.mxu0 %v1014
  %1235 = vmatpush.msra.mxu0 %v1013
  %1236 = vmatpush.msra.mxu0 %v1012
  %1237 = vmatpush.msra.mxu0 %v1011
  %1238 = vmatpush.msra.mxu0 %v1010
  %1239 = vmatpush.msra.mxu0 %v1009
  %1240 = vmatpush.msra.mxu0 %v1008
  %1241 = vmatpush.msra.mxu0 %v1007
  %1242 = vmatpush.msra.mxu0 %v1006
  %1243 = vmatmul.f32.gmra.mxu0 %v600
  %v1244 = vpop.f32.mrf.mxu0
  %v1245 = vadd.f32 %v1204, %v1244
  %1246 = vmatmul.f32.gmra.mxu0 %v603
  %v1247 = vpop.f32.mrf.mxu0
  %v1248 = vadd.f32 %v1207, %v1247
  %1249 = vmatmul.f32.gmra.mxu0 %v606
  %v1250 = vpop.f32.mrf.mxu0
  %v1251 = vadd.f32 %v1210, %v1250
  %1252 = vmatmul.f32.gmra.mxu0 %v609
  %v1253 = vpop.f32.mrf.mxu0
  %v1254 = vadd.f32 %v1213, %v1253
  %1255 = vmatmul.f32.gmra.mxu0 %v612
  %v1256 = vpop.f32.mrf.mxu0
  %v1257 = vadd.f32 %v1216, %v1256
  %1258 = vmatmul.f32.gmra.mxu0 %v615
  %v1259 = vpop.f32.mrf.mxu0
  %v1260 = vadd.f32 %v1219, %v1259
  %1261 = vmatmul.f32.gmra.mxu0 %v618
  %v1262 = vpop.f32.mrf.mxu0
  %v1263 = vadd.f32 %v1222, %v1262
  %1264 = vmatmul.f32.gmra.mxu0 %v621
  %v1265 = vpop.f32.mrf.mxu0
  %v1266 = vadd.f32 %v1225, %v1265
  %1267 = vdwg.mxu0
  %1268 = vmatpush.msra.mxu0 0.0
  %1269 = vmatpush.msra.mxu0 0.0
  %1270 = vmatpush.msra.mxu0 0.0
  %1271 = vmatpush.msra.mxu0 0.0
  %1272 = vmatpush.msra.mxu0 0.0
  %1273 = vmatpush.msra.mxu0 0.0
  %1274 = vmatpush.msra.mxu0 %v1127
  %1275 = vmatpush.msra.mxu0 %v1124
  %1276 = vmatpush.msra.mxu0 %v1123
  %1277 = vmatpush.msra.mxu0 %v1122
  %1278 = vmatpush.msra.mxu0 %v1121
  %1279 = vmatpush.msra.mxu0 %v1120
  %1280 = vmatpush.msra.mxu0 %v1119
  %1281 = vmatpush.msra.mxu0 %v1118
  %1282 = vmatpush.msra.mxu0 %v1117
  %1283 = vmatpush.msra.mxu0 %v1116
  %1284 = vmatmul.f32.gmra.mxu0 %v932
  %v1285 = vpop.f32.mrf.mxu0
  %v1286 = vadd.f32 0.0, %v1285
  %1287 = vmatmul.f32.gmra.mxu0 %v934
  %v1288 = vpop.f32.mrf.mxu0
  %v1289 = vadd.f32 0.0, %v1288
  %1290 = vmatmul.f32.gmra.mxu0 %v936
  %v1291 = vpop.f32.mrf.mxu0
  %v1292 = vadd.f32 0.0, %v1291
  %1293 = vmatmul.f32.gmra.mxu0 %v938
  %v1294 = vpop.f32.mrf.mxu0
  %v1295 = vadd.f32 0.0, %v1294
  %1296 = vmatmul.f32.gmra.mxu0 %v940
  %v1297 = vpop.f32.mrf.mxu0
  %v1298 = vadd.f32 0.0, %v1297
  %1299 = vmatmul.f32.gmra.mxu0 %v942
  %v1300 = vpop.f32.mrf.mxu0
  %v1301 = vadd.f32 0.0, %v1300
  %1302 = vmatmul.f32.gmra.mxu0 %v944
  %v1303 = vpop.f32.mrf.mxu0
  %v1304 = vadd.f32 0.0, %v1303
  %1305 = vmatmul.f32.gmra.mxu0 %v946
  %v1306 = vpop.f32.mrf.mxu0
  %v1307 = vadd.f32 0.0, %v1306
  %1308 = vdwg.mxu0
  %v1309 = vadd.f32 %v1245, %v1286
  %v1310 = vadd.f32 %v1248, %v1289
  %v1311 = vadd.f32 %v1251, %v1292
  %v1312 = vadd.f32 %v1254, %v1295
  %v1313 = vadd.f32 %v1257, %v1298
  %v1314 = vadd.f32 %v1260, %v1301
  %v1315 = vadd.f32 %v1263, %v1304
  %v1316 = vadd.f32 %v1266, %v1307
  %v1317 = vmax.f32 %v1178, %v1309
  %v1318 = vmax.f32 %v1179, %v1310
  %v1319 = vmax.f32 %v1180, %v1311
  %v1320 = vmax.f32 %v1181, %v1312
  %v1321 = vmax.f32 %v1182, %v1313
  %v1322 = vmax.f32 %v1183, %v1314
  %v1323 = vmax.f32 %v1184, %v1315
  %v1324 = vmax.f32 %v1185, %v1316
  %v1325 = vld [vmem:[%s5] sm:$0x1]
  %v1327 = vperm.slane %v1325, 0
  %v1329 = vadd.f32 %v1317, %v1327
  %v1330 = vadd.f32 %v1318, %v1327
  %v1331 = vadd.f32 %v1319, %v1327
  %v1332 = vadd.f32 %v1320, %v1327
  %v1333 = vadd.f32 %v1321, %v1327
  %v1334 = vadd.f32 %v1322, %v1327
  %v1335 = vadd.f32 %v1323, %v1327
  %v1336 = vadd.f32 %v1324, %v1327
  %v1337 = vmax.f32 %v1329, 0.0
  %v1338 = vmax.f32 %v1330, 0.0
  %v1339 = vmax.f32 %v1331, 0.0
  %v1340 = vmax.f32 %v1332, 0.0
  %v1341 = vmax.f32 %v1333, 0.0
  %v1342 = vmax.f32 %v1334, 0.0
  %v1343 = vmax.f32 %v1335, 0.0
  %v1344 = vmax.f32 %v1336, 0.0
  %v1345 = vld [vmem:[%s6] sm:$0xff]
  %v1346 = vld [vmem:[%s6 + $0x8] sm:$0xff]
  %v1347 = vld [vmem:[%s6 + $0x10] sm:$0xff]
  %v1348 = vld [vmem:[%s6 + $0x18] sm:$0xff]
  %v1349 = vld [vmem:[%s6 + $0x20] sm:$0xff]
  %v1350 = vld [vmem:[%s6 + $0x28] sm:$0xff]
  %v1351 = vld [vmem:[%s6 + $0x30] sm:$0xff]
  %v1352 = vld [vmem:[%s6 + $0x38] sm:$0xff]
  %v1353 = vld [vmem:[%s6 + $0x40] sm:$0xff]
  %v1354 = vld [vmem:[%s6 + $0x48] sm:$0xff]
  %s1355 = scalar_lea.vmem %s6, 80
  %v1356 = vld [vmem:[%s1355] sm:$0xff]
  %v1357 = vld [vmem:[%s1355 + $0x8] sm:$0xff]
  %v1358 = vld [vmem:[%s1355 + $0x10] sm:$0xff]
  %v1359 = vld [vmem:[%s1355 + $0x18] sm:$0xff]
  %v1360 = vld [vmem:[%s1355 + $0x20] sm:$0xff]
  %v1361 = vld [vmem:[%s1355 + $0x28] sm:$0xff]
  %v1362 = vld [vmem:[%s1355 + $0x30] sm:$0xff]
  %v1363 = vld [vmem:[%s1355 + $0x38] sm:$0xff]
  %v1364 = vld [vmem:[%s1355 + $0x40] sm:$0xff]
  %v1365 = vld [vmem:[%s1355 + $0x48] sm:$0xff]
  %v1374 = vrot.slane %v1337, 1
  %v1375 = vrot.slane %v1338, 1
  %v1376 = vsel %vm748, %v1374, %v1375
  %v1377 = vrot.slane %v1339, 1
  %v1378 = vsel %vm748, %v1375, %v1377
  %v1379 = vrot.slane %v1340, 1
  %v1380 = vsel %vm748, %v1377, %v1379
  %v1381 = vrot.slane %v1341, 1
  %v1382 = vsel %vm748, %v1379, %v1381
  %v1383 = vrot.slane %v1342, 1
  %v1384 = vsel %vm748, %v1381, %v1383
  %v1385 = vrot.slane %v1343, 1
  %v1386 = vsel %vm748, %v1383, %v1385
  %v1387 = vrot.slane %v1344, 1
  %v1388 = vsel %vm748, %v1385, %v1387
  %v1389 = vsel %vm748, %v1387, %v764
  %vm1390 = vcmask 654336
  %v1391 = vsel %vm1390, %v1376, 0
  %v1393 = vsel %vm1390, %v1378, 0
  %v1395 = vsel %vm1390, %v1380, 0
  %v1397 = vsel %vm1390, %v1382, 0
  %v1399 = vsel %vm1390, %v1384, 0
  %v1401 = vsel %vm1390, %v1386, 0
  %v1403 = vsel %vm1390, %v1388, 0
  %v1405 = vsel %vm1390, %v1389, 0
  %1407 = vmatpush.msra.mxu0 0.0
  %1408 = vmatpush.msra.mxu0 0.0
  %1409 = vmatpush.msra.mxu0 0.0
  %1410 = vmatpush.msra.mxu0 0.0
  %1411 = vmatpush.msra.mxu0 0.0
  %1412 = vmatpush.msra.mxu0 0.0
  %1413 = vmatpush.msra.mxu0 %v1365
  %1414 = vmatpush.msra.mxu0 %v1364
  %1415 = vmatpush.msra.mxu0 %v1363
  %1416 = vmatpush.msra.mxu0 %v1362
  %1417 = vmatpush.msra.mxu0 %v1361
  %1418 = vmatpush.msra.mxu0 %v1360
  %1419 = vmatpush.msra.mxu0 %v1359
  %1420 = vmatpush.msra.mxu0 %v1358
  %1421 = vmatpush.msra.mxu0 %v1357
  %1422 = vmatpush.msra.mxu0 %v1356
  %1423 = vmatmul.f32.gmra.mxu0 %v1391
  %v1424 = vpop.f32.mrf.mxu0
  %v1425 = vadd.f32 0.0, %v1424
  %1426 = vmatmul.f32.gmra.mxu0 %v1393
  %v1427 = vpop.f32.mrf.mxu0
  %v1428 = vadd.f32 0.0, %v1427
  %1429 = vmatmul.f32.gmra.mxu0 %v1395
  %v1430 = vpop.f32.mrf.mxu0
  %v1431 = vadd.f32 0.0, %v1430
  %1432 = vmatmul.f32.gmra.mxu0 %v1397
  %v1433 = vpop.f32.mrf.mxu0
  %v1434 = vadd.f32 0.0, %v1433
  %1435 = vmatmul.f32.gmra.mxu0 %v1399
  %v1436 = vpop.f32.mrf.mxu0
  %v1437 = vadd.f32 0.0, %v1436
  %1438 = vmatmul.f32.gmra.mxu0 %v1401
  %v1439 = vpop.f32.mrf.mxu0
  %v1440 = vadd.f32 0.0, %v1439
  %1441 = vmatmul.f32.gmra.mxu0 %v1403
  %v1442 = vpop.f32.mrf.mxu0
  %v1443 = vadd.f32 0.0, %v1442
  %1444 = vmatmul.f32.gmra.mxu0 %v1405
  %v1445 = vpop.f32.mrf.mxu0
  %v1446 = vadd.f32 0.0, %v1445
  %1447 = vdwg.mxu0
  %v1448 = vsel %vm1390, %v1337, 0
  %v1450 = vsel %vm1390, %v1338, 0
  %v1452 = vsel %vm1390, %v1339, 0
  %v1454 = vsel %vm1390, %v1340, 0
  %v1456 = vsel %vm1390, %v1341, 0
  %v1458 = vsel %vm1390, %v1342, 0
  %v1460 = vsel %vm1390, %v1343, 0
  %v1462 = vsel %vm1390, %v1344, 0
  %1464 = vmatpush.msra.mxu0 0.0
  %1465 = vmatpush.msra.mxu0 0.0
  %1466 = vmatpush.msra.mxu0 0.0
  %1467 = vmatpush.msra.mxu0 0.0
  %1468 = vmatpush.msra.mxu0 0.0
  %1469 = vmatpush.msra.mxu0 0.0
  %1470 = vmatpush.msra.mxu0 %v1354
  %1471 = vmatpush.msra.mxu0 %v1353
  %1472 = vmatpush.msra.mxu0 %v1352
  %1473 = vmatpush.msra.mxu0 %v1351
  %1474 = vmatpush.msra.mxu0 %v1350
  %1475 = vmatpush.msra.mxu0 %v1349
  %1476 = vmatpush.msra.mxu0 %v1348
  %1477 = vmatpush.msra.mxu0 %v1347
  %1478 = vmatpush.msra.mxu0 %v1346
  %1479 = vmatpush.msra.mxu0 %v1345
  %1480 = vmatmul.f32.gmra.mxu0 %v1448
  %v1481 = vpop.f32.mrf.mxu0
  %v1482 = vadd.f32 %v1425, %v1481
  %1483 = vmatmul.f32.gmra.mxu0 %v1450
  %v1484 = vpop.f32.mrf.mxu0
  %v1485 = vadd.f32 %v1428, %v1484
  %1486 = vmatmul.f32.gmra.mxu0 %v1452
  %v1487 = vpop.f32.mrf.mxu0
  %v1488 = vadd.f32 %v1431, %v1487
  %1489 = vmatmul.f32.gmra.mxu0 %v1454
  %v1490 = vpop.f32.mrf.mxu0
  %v1491 = vadd.f32 %v1434, %v1490
  %1492 = vmatmul.f32.gmra.mxu0 %v1456
  %v1493 = vpop.f32.mrf.mxu0
  %v1494 = vadd.f32 %v1437, %v1493
  %1495 = vmatmul.f32.gmra.mxu0 %v1458
  %v1496 = vpop.f32.mrf.mxu0
  %v1497 = vadd.f32 %v1440, %v1496
  %1498 = vmatmul.f32.gmra.mxu0 %v1460
  %v1499 = vpop.f32.mrf.mxu0
  %v1500 = vadd.f32 %v1443, %v1499
  %1501 = vmatmul.f32.gmra.mxu0 %v1462
  %v1502 = vpop.f32.mrf.mxu0
  %v1503 = vadd.f32 %v1446, %v1502
  %1504 = vdwg.mxu0
  %s1505 = scalar_lea.vmem %s6, 160
  %v1506 = vld [vmem:[%s1505] sm:$0xff]
  %v1507 = vld [vmem:[%s1505 + $0x8] sm:$0xff]
  %v1508 = vld [vmem:[%s1505 + $0x10] sm:$0xff]
  %v1509 = vld [vmem:[%s1505 + $0x18] sm:$0xff]
  %v1510 = vld [vmem:[%s1505 + $0x20] sm:$0xff]
  %v1511 = vld [vmem:[%s1505 + $0x28] sm:$0xff]
  %v1512 = vld [vmem:[%s1505 + $0x30] sm:$0xff]
  %v1513 = vld [vmem:[%s1505 + $0x38] sm:$0xff]
  %v1514 = vld [vmem:[%s1505 + $0x40] sm:$0xff]
  %v1515 = vld [vmem:[%s1505 + $0x48] sm:$0xff]
  %v1516 = vrot.slane %v1337, 2
  %v1517 = vrot.slane %v1338, 2
  %v1518 = vsel %vm623, %v1516, %v1517
  %v1519 = vrot.slane %v1339, 2
  %v1520 = vsel %vm623, %v1517, %v1519
  %v1521 = vrot.slane %v1340, 2
  %v1522 = vsel %vm623, %v1519, %v1521
  %v1523 = vrot.slane %v1341, 2
  %v1524 = vsel %vm623, %v1521, %v1523
  %v1525 = vrot.slane %v1342, 2
  %v1526 = vsel %vm623, %v1523, %v1525
  %v1527 = vrot.slane %v1343, 2
  %v1528 = vsel %vm623, %v1525, %v1527
  %v1529 = vrot.slane %v1344, 2
  %v1530 = vsel %vm623, %v1527, %v1529
  %v1531 = vrot.slane 0.0, 2
  %v1532 = vsel %vm623, %v1529, %v1531
  %v1533 = vsel %vm1390, %v1518, 0
  %v1535 = vsel %vm1390, %v1520, 0
  %v1537 = vsel %vm1390, %v1522, 0
  %v1539 = vsel %vm1390, %v1524, 0
  %v1541 = vsel %vm1390, %v1526, 0
  %v1543 = vsel %vm1390, %v1528, 0
  %v1545 = vsel %vm1390, %v1530, 0
  %v1547 = vsel %vm1390, %v1532, 0
  %1549 = vmatpush.msra.mxu0 0.0
  %1550 = vmatpush.msra.mxu0 0.0
  %1551 = vmatpush.msra.mxu0 0.0
  %1552 = vmatpush.msra.mxu0 0.0
  %1553 = vmatpush.msra.mxu0 0.0
  %1554 = vmatpush.msra.mxu0 0.0
  %1555 = vmatpush.msra.mxu0 %v1515
  %1556 = vmatpush.msra.mxu0 %v1514
  %1557 = vmatpush.msra.mxu0 %v1513
  %1558 = vmatpush.msra.mxu0 %v1512
  %1559 = vmatpush.msra.mxu0 %v1511
  %1560 = vmatpush.msra.mxu0 %v1510
  %1561 = vmatpush.msra.mxu0 %v1509
  %1562 = vmatpush.msra.mxu0 %v1508
  %1563 = vmatpush.msra.mxu0 %v1507
  %1564 = vmatpush.msra.mxu0 %v1506
  %1565 = vmatmul.f32.gmra.mxu0 %v1533
  %v1566 = vpop.f32.mrf.mxu0
  %v1567 = vadd.f32 0.0, %v1566
  %1568 = vmatmul.f32.gmra.mxu0 %v1535
  %v1569 = vpop.f32.mrf.mxu0
  %v1570 = vadd.f32 0.0, %v1569
  %1571 = vmatmul.f32.gmra.mxu0 %v1537
  %v1572 = vpop.f32.mrf.mxu0
  %v1573 = vadd.f32 0.0, %v1572
  %1574 = vmatmul.f32.gmra.mxu0 %v1539
  %v1575 = vpop.f32.mrf.mxu0
  %v1576 = vadd.f32 0.0, %v1575
  %1577 = vmatmul.f32.gmra.mxu0 %v1541
  %v1578 = vpop.f32.mrf.mxu0
  %v1579 = vadd.f32 0.0, %v1578
  %1580 = vmatmul.f32.gmra.mxu0 %v1543
  %v1581 = vpop.f32.mrf.mxu0
  %v1582 = vadd.f32 0.0, %v1581
  %1583 = vmatmul.f32.gmra.mxu0 %v1545
  %v1584 = vpop.f32.mrf.mxu0
  %v1585 = vadd.f32 0.0, %v1584
  %1586 = vmatmul.f32.gmra.mxu0 %v1547
  %v1587 = vpop.f32.mrf.mxu0
  %v1588 = vadd.f32 0.0, %v1587
  %1589 = vdwg.mxu0
  %v1590 = vadd.f32 %v1482, %v1567
  %v1591 = vadd.f32 %v1485, %v1570
  %v1592 = vadd.f32 %v1488, %v1573
  %v1593 = vadd.f32 %v1491, %v1576
  %v1594 = vadd.f32 %v1494, %v1579
  %v1595 = vadd.f32 %v1497, %v1582
  %v1596 = vadd.f32 %v1500, %v1585
  %v1597 = vadd.f32 %v1503, %v1588
  %s1598 = scalar_lea.vmem %s6, 240
  %v1599 = vld [vmem:[%s1598] sm:$0xff]
  %v1600 = vld [vmem:[%s1598 + $0x8] sm:$0xff]
  %v1601 = vld [vmem:[%s1598 + $0x10] sm:$0xff]
  %v1602 = vld [vmem:[%s1598 + $0x18] sm:$0xff]
  %v1603 = vld [vmem:[%s1598 + $0x20] sm:$0xff]
  %v1604 = vld [vmem:[%s1598 + $0x28] sm:$0xff]
  %v1605 = vld [vmem:[%s1598 + $0x30] sm:$0xff]
  %v1606 = vld [vmem:[%s1598 + $0x38] sm:$0xff]
  %v1607 = vld [vmem:[%s1598 + $0x40] sm:$0xff]
  %v1608 = vld [vmem:[%s1598 + $0x48] sm:$0xff]
  %vm1609 = vcmask 1044480
  %v1610 = vrot.slane %v1337, 3
  %v1611 = vrot.slane %v1338, 3
  %v1612 = vsel %vm1609, %v1610, %v1611
  %v1613 = vrot.slane %v1339, 3
  %v1614 = vsel %vm1609, %v1611, %v1613
  %v1615 = vrot.slane %v1340, 3
  %v1616 = vsel %vm1609, %v1613, %v1615
  %v1617 = vrot.slane %v1341, 3
  %v1618 = vsel %vm1609, %v1615, %v1617
  %v1619 = vrot.slane %v1342, 3
  %v1620 = vsel %vm1609, %v1617, %v1619
  %v1621 = vrot.slane %v1343, 3
  %v1622 = vsel %vm1609, %v1619, %v1621
  %v1623 = vrot.slane %v1344, 3
  %v1624 = vsel %vm1609, %v1621, %v1623
  %v1625 = vrot.slane 0.0, 3
  %v1626 = vsel %vm1609, %v1623, %v1625
  %v1627 = vsel %vm1390, %v1612, 0
  %v1629 = vsel %vm1390, %v1614, 0
  %v1631 = vsel %vm1390, %v1616, 0
  %v1633 = vsel %vm1390, %v1618, 0
  %v1635 = vsel %vm1390, %v1620, 0
  %v1637 = vsel %vm1390, %v1622, 0
  %v1639 = vsel %vm1390, %v1624, 0
  %v1641 = vsel %vm1390, %v1626, 0
  %1643 = vmatpush.msra.mxu0 0.0
  %1644 = vmatpush.msra.mxu0 0.0
  %1645 = vmatpush.msra.mxu0 0.0
  %1646 = vmatpush.msra.mxu0 0.0
  %1647 = vmatpush.msra.mxu0 0.0
  %1648 = vmatpush.msra.mxu0 0.0
  %1649 = vmatpush.msra.mxu0 %v1608
  %1650 = vmatpush.msra.mxu0 %v1607
  %1651 = vmatpush.msra.mxu0 %v1606
  %1652 = vmatpush.msra.mxu0 %v1605
  %1653 = vmatpush.msra.mxu0 %v1604
  %1654 = vmatpush.msra.mxu0 %v1603
  %1655 = vmatpush.msra.mxu0 %v1602
  %1656 = vmatpush.msra.mxu0 %v1601
  %1657 = vmatpush.msra.mxu0 %v1600
  %1658 = vmatpush.msra.mxu0 %v1599
  %1659 = vmatmul.f32.gmra.mxu0 %v1627
  %v1660 = vpop.f32.mrf.mxu0
  %v1661 = vadd.f32 0.0, %v1660
  %1662 = vmatmul.f32.gmra.mxu0 %v1629
  %v1663 = vpop.f32.mrf.mxu0
  %v1664 = vadd.f32 0.0, %v1663
  %1665 = vmatmul.f32.gmra.mxu0 %v1631
  %v1666 = vpop.f32.mrf.mxu0
  %v1667 = vadd.f32 0.0, %v1666
  %1668 = vmatmul.f32.gmra.mxu0 %v1633
  %v1669 = vpop.f32.mrf.mxu0
  %v1670 = vadd.f32 0.0, %v1669
  %1671 = vmatmul.f32.gmra.mxu0 %v1635
  %v1672 = vpop.f32.mrf.mxu0
  %v1673 = vadd.f32 0.0, %v1672
  %1674 = vmatmul.f32.gmra.mxu0 %v1637
  %v1675 = vpop.f32.mrf.mxu0
  %v1676 = vadd.f32 0.0, %v1675
  %1677 = vmatmul.f32.gmra.mxu0 %v1639
  %v1678 = vpop.f32.mrf.mxu0
  %v1679 = vadd.f32 0.0, %v1678
  %1680 = vmatmul.f32.gmra.mxu0 %v1641
  %v1681 = vpop.f32.mrf.mxu0
  %v1682 = vadd.f32 0.0, %v1681
  %1683 = vdwg.mxu0
  %v1684 = vadd.f32 %v1590, %v1661
  %v1685 = vadd.f32 %v1591, %v1664
  %v1686 = vadd.f32 %v1592, %v1667
  %v1687 = vadd.f32 %v1593, %v1670
  %v1688 = vadd.f32 %v1594, %v1673
  %v1689 = vadd.f32 %v1595, %v1676
  %v1690 = vadd.f32 %v1596, %v1679
  %v1691 = vadd.f32 %v1597, %v1682
  %s1692 = scalar_lea.vmem %s6, 320
  %v1693 = vld [vmem:[%s1692] sm:$0xff]
  %v1694 = vld [vmem:[%s1692 + $0x8] sm:$0xff]
  %v1695 = vld [vmem:[%s1692 + $0x10] sm:$0xff]
  %v1696 = vld [vmem:[%s1692 + $0x18] sm:$0xff]
  %v1697 = vld [vmem:[%s1692 + $0x20] sm:$0xff]
  %v1698 = vld [vmem:[%s1692 + $0x28] sm:$0xff]
  %v1699 = vld [vmem:[%s1692 + $0x30] sm:$0xff]
  %v1700 = vld [vmem:[%s1692 + $0x38] sm:$0xff]
  %v1701 = vld [vmem:[%s1692 + $0x40] sm:$0xff]
  %v1702 = vld [vmem:[%s1692 + $0x48] sm:$0xff]
  %vm1703 = vcmask 1043456
  %v1704 = vrot.slane %v1337, 4
  %v1705 = vrot.slane %v1338, 4
  %v1706 = vsel %vm1703, %v1704, %v1705
  %v1707 = vrot.slane %v1339, 4
  %v1708 = vsel %vm1703, %v1705, %v1707
  %v1709 = vrot.slane %v1340, 4
  %v1710 = vsel %vm1703, %v1707, %v1709
  %v1711 = vrot.slane %v1341, 4
  %v1712 = vsel %vm1703, %v1709, %v1711
  %v1713 = vrot.slane %v1342, 4
  %v1714 = vsel %vm1703, %v1711, %v1713
  %v1715 = vrot.slane %v1343, 4
  %v1716 = vsel %vm1703, %v1713, %v1715
  %v1717 = vrot.slane %v1344, 4
  %v1718 = vsel %vm1703, %v1715, %v1717
  %v1719 = vrot.slane 0.0, 4
  %v1720 = vsel %vm1703, %v1717, %v1719
  %v1721 = vsel %vm1390, %v1706, 0
  %v1723 = vsel %vm1390, %v1708, 0
  %v1725 = vsel %vm1390, %v1710, 0
  %v1727 = vsel %vm1390, %v1712, 0
  %v1729 = vsel %vm1390, %v1714, 0
  %v1731 = vsel %vm1390, %v1716, 0
  %v1733 = vsel %vm1390, %v1718, 0
  %v1735 = vsel %vm1390, %v1720, 0
  %1737 = vmatpush.msra.mxu0 0.0
  %1738 = vmatpush.msra.mxu0 0.0
  %1739 = vmatpush.msra.mxu0 0.0
  %1740 = vmatpush.msra.mxu0 0.0
  %1741 = vmatpush.msra.mxu0 0.0
  %1742 = vmatpush.msra.mxu0 0.0
  %1743 = vmatpush.msra.mxu0 %v1702
  %1744 = vmatpush.msra.mxu0 %v1701
  %1745 = vmatpush.msra.mxu0 %v1700
  %1746 = vmatpush.msra.mxu0 %v1699
  %1747 = vmatpush.msra.mxu0 %v1698
  %1748 = vmatpush.msra.mxu0 %v1697
  %1749 = vmatpush.msra.mxu0 %v1696
  %1750 = vmatpush.msra.mxu0 %v1695
  %1751 = vmatpush.msra.mxu0 %v1694
  %1752 = vmatpush.msra.mxu0 %v1693
  %1753 = vmatmul.f32.gmra.mxu0 %v1721
  %v1754 = vpop.f32.mrf.mxu0
  %v1755 = vadd.f32 0.0, %v1754
  %1756 = vmatmul.f32.gmra.mxu0 %v1723
  %v1757 = vpop.f32.mrf.mxu0
  %v1758 = vadd.f32 0.0, %v1757
  %1759 = vmatmul.f32.gmra.mxu0 %v1725
  %v1760 = vpop.f32.mrf.mxu0
  %v1761 = vadd.f32 0.0, %v1760
  %1762 = vmatmul.f32.gmra.mxu0 %v1727
  %v1763 = vpop.f32.mrf.mxu0
  %v1764 = vadd.f32 0.0, %v1763
  %1765 = vmatmul.f32.gmra.mxu0 %v1729
  %v1766 = vpop.f32.mrf.mxu0
  %v1767 = vadd.f32 0.0, %v1766
  %1768 = vmatmul.f32.gmra.mxu0 %v1731
  %v1769 = vpop.f32.mrf.mxu0
  %v1770 = vadd.f32 0.0, %v1769
  %1771 = vmatmul.f32.gmra.mxu0 %v1733
  %v1772 = vpop.f32.mrf.mxu0
  %v1773 = vadd.f32 0.0, %v1772
  %1774 = vmatmul.f32.gmra.mxu0 %v1735
  %v1775 = vpop.f32.mrf.mxu0
  %v1776 = vadd.f32 0.0, %v1775
  %1777 = vdwg.mxu0
  %v1778 = vadd.f32 %v1684, %v1755
  %v1779 = vadd.f32 %v1685, %v1758
  %v1780 = vadd.f32 %v1686, %v1761
  %v1781 = vadd.f32 %v1687, %v1764
  %v1782 = vadd.f32 %v1688, %v1767
  %v1783 = vadd.f32 %v1689, %v1770
  %v1784 = vadd.f32 %v1690, %v1773
  %v1785 = vadd.f32 %v1691, %v1776
  %v1786 = vld [vmem:[%s7] sm:$0x1]
  %v1788 = vperm.slane %v1786, 0
  %v1790 = vadd.f32 %v1778, %v1788
  %v1791 = vadd.f32 %v1779, %v1788
  %v1792 = vadd.f32 %v1780, %v1788
  %v1793 = vadd.f32 %v1781, %v1788
  %v1794 = vadd.f32 %v1782, %v1788
  %v1795 = vadd.f32 %v1783, %v1788
  %v1796 = vadd.f32 %v1784, %v1788
  %v1797 = vadd.f32 %v1785, %v1788
  %v1798 = vmax.f32 %v1790, 0.0
  %v1799 = vmax.f32 %v1791, 0.0
  %v1800 = vmax.f32 %v1792, 0.0
  %v1801 = vmax.f32 %v1793, 0.0
  %v1802 = vmax.f32 %v1794, 0.0
  %v1803 = vmax.f32 %v1795, 0.0
  %v1804 = vmax.f32 %v1796, 0.0
  %v1805 = vmax.f32 %v1797, 0.0
  %v1806 = vld [vmem:[%s8] sm:$0xff]
  %v1807 = vld [vmem:[%s8 + $0x8] sm:$0xff]
  %v1808 = vld [vmem:[%s8 + $0x10] sm:$0xff]
  %v1809 = vld [vmem:[%s8 + $0x18] sm:$0xff]
  %v1810 = vld [vmem:[%s8 + $0x20] sm:$0xff]
  %v1811 = vld [vmem:[%s8 + $0x28] sm:$0xff]
  %v1812 = vld [vmem:[%s8 + $0x30] sm:$0xff]
  %v1813 = vld [vmem:[%s8 + $0x38] sm:$0xff]
  %v1814 = vld [vmem:[%s8 + $0x40] sm:$0xff]
  %v1815 = vld [vmem:[%s8 + $0x48] sm:$0xff]
  %v1816 = vld [vmem:[%s8 + $0x50] sm:$0xff]
  %v1817 = vld [vmem:[%s8 + $0x58] sm:$0xff]
  %v1818 = vld [vmem:[%s8 + $0x60] sm:$0xff]
  %v1819 = vld [vmem:[%s8 + $0x68] sm:$0xff]
  %v1820 = vld [vmem:[%s8 + $0x70] sm:$0xff]
  %v1821 = vld [vmem:[%s9] sm:$0x1]
  %v1823 = vperm.slane %v1821, 0
  %vm1825 = vcmask 982016
  %v1827 = vsel %vm1825, %v1798, 0
  %v1830 = vsel %vm1825, %v1799, 0
  %v1833 = vsel %vm1825, %v1800, 0
  %v1836 = vsel %vm1825, %v1801, 0
  %v1839 = vsel %vm1825, %v1802, 0
  %v1842 = vsel %vm1825, %v1803, 0
  %v1845 = vsel %vm1825, %v1804, 0
  %v1848 = vsel %vm1825, %v1805, 0
  %1850 = vmatpush.msra.mxu0 0.0
  %1851 = vmatpush.msra.mxu0 %v1820
  %1852 = vmatpush.msra.mxu0 %v1819
  %1853 = vmatpush.msra.mxu0 %v1818
  %1854 = vmatpush.msra.mxu0 %v1817
  %1855 = vmatpush.msra.mxu0 %v1816
  %1856 = vmatpush.msra.mxu0 %v1815
  %1857 = vmatpush.msra.mxu0 %v1814
  %1858 = vmatpush.msra.mxu0 %v1813
  %1859 = vmatpush.msra.mxu0 %v1812
  %1860 = vmatpush.msra.mxu0 %v1811
  %1861 = vmatpush.msra.mxu0 %v1810
  %1862 = vmatpush.msra.mxu0 %v1809
  %1863 = vmatpush.msra.mxu0 %v1808
  %1864 = vmatpush.msra.mxu0 %v1807
  %1865 = vmatpush.msra.mxu0 %v1806
  %1866 = vmatmul.f32.gmra.mxu0 %v1827
  %v1867 = vpop.f32.mrf.mxu0
  %v1868 = vadd.f32 %v1823, %v1867
  %1869 = vmatmul.f32.gmra.mxu0 %v1830
  %v1870 = vpop.f32.mrf.mxu0
  %v1871 = vadd.f32 %v1823, %v1870
  %1872 = vmatmul.f32.gmra.mxu0 %v1833
  %v1873 = vpop.f32.mrf.mxu0
  %v1874 = vadd.f32 %v1823, %v1873
  %1875 = vmatmul.f32.gmra.mxu0 %v1836
  %v1876 = vpop.f32.mrf.mxu0
  %v1877 = vadd.f32 %v1823, %v1876
  %1878 = vmatmul.f32.gmra.mxu0 %v1839
  %v1879 = vpop.f32.mrf.mxu0
  %v1880 = vadd.f32 %v1823, %v1879
  %1881 = vmatmul.f32.gmra.mxu0 %v1842
  %v1882 = vpop.f32.mrf.mxu0
  %v1883 = vadd.f32 %v1823, %v1882
  %1884 = vmatmul.f32.gmra.mxu0 %v1845
  %v1885 = vpop.f32.mrf.mxu0
  %v1886 = vadd.f32 %v1823, %v1885
  %1887 = vmatmul.f32.gmra.mxu0 %v1848
  %v1888 = vpop.f32.mrf.mxu0
  %v1889 = vadd.f32 %v1823, %v1888
  %1890 = vdwg.mxu0
  %v1891 = vmax.f32 %v1868, 0.0
  %v1892 = vmax.f32 %v1871, 0.0
  %v1893 = vmax.f32 %v1874, 0.0
  %v1894 = vmax.f32 %v1877, 0.0
  %v1895 = vmax.f32 %v1880, 0.0
  %v1896 = vmax.f32 %v1883, 0.0
  %v1897 = vmax.f32 %v1886, 0.0
  %v1898 = vmax.f32 %v1889, 0.0
  %v1899 = vld [vmem:[%s10] sm:$0xff]
  %v1900 = vld [vmem:[%s10 + $0x8] sm:$0xff]
  %v1901 = vld [vmem:[%s10 + $0x10] sm:$0xff]
  %v1902 = vld [vmem:[%s10 + $0x18] sm:$0xff]
  %v1903 = vld [vmem:[%s10 + $0x20] sm:$0xff]
  %v1904 = vld [vmem:[%s10 + $0x28] sm:$0xff]
  %v1905 = vld [vmem:[%s10 + $0x30] sm:$0xff]
  %v1906 = vld [vmem:[%s10 + $0x38] sm:$0xff]
  %v1907 = vld [vmem:[%s10 + $0x40] sm:$0xff]
  %v1908 = vld [vmem:[%s10 + $0x48] sm:$0xff]
  %v1909 = vld [vmem:[%s10 + $0x50] sm:$0xf]
  %v1910 = vld [vmem:[%s11] sm:$0x1]
  %v1912 = vperm.slane %v1910, 0
  %vm1914 = vcmask 687104
  %v1916 = vsel %vm1914, %v1891, 0
  %v1919 = vsel %vm1914, %v1892, 0
  %v1922 = vsel %vm1914, %v1893, 0
  %v1925 = vsel %vm1914, %v1894, 0
  %v1928 = vsel %vm1914, %v1895, 0
  %v1931 = vsel %vm1914, %v1896, 0
  %v1934 = vsel %vm1914, %v1897, 0
  %v1937 = vsel %vm1914, %v1898, 0
  %v1940 = vsel %vm1703, %v1909, 0
  %1942 = vmatpush.msra.mxu0 0.0
  %1943 = vmatpush.msra.mxu0 0.0
  %1944 = vmatpush.msra.mxu0 0.0
  %1945 = vmatpush.msra.mxu0 0.0
  %1946 = vmatpush.msra.mxu0 0.0
  %1947 = vmatpush.msra.mxu0 %v1940
  %1948 = vmatpush.msra.mxu0 %v1908
  %1949 = vmatpush.msra.mxu0 %v1907
  %1950 = vmatpush.msra.mxu0 %v1906
  %1951 = vmatpush.msra.mxu0 %v1905
  %1952 = vmatpush.msra.mxu0 %v1904
  %1953 = vmatpush.msra.mxu0 %v1903
  %1954 = vmatpush.msra.mxu0 %v1902
  %1955 = vmatpush.msra.mxu0 %v1901
  %1956 = vmatpush.msra.mxu0 %v1900
  %1957 = vmatpush.msra.mxu0 %v1899
  %1958 = vmatmul.f32.gmra.mxu0 %v1916
  %v1959 = vpop.f32.mrf.mxu0
  %v1960 = vadd.f32 %v1912, %v1959
  %1961 = vmatmul.f32.gmra.mxu0 %v1919
  %v1962 = vpop.f32.mrf.mxu0
  %v1963 = vadd.f32 %v1912, %v1962
  %1964 = vmatmul.f32.gmra.mxu0 %v1922
  %v1965 = vpop.f32.mrf.mxu0
  %v1966 = vadd.f32 %v1912, %v1965
  %1967 = vmatmul.f32.gmra.mxu0 %v1925
  %v1968 = vpop.f32.mrf.mxu0
  %v1969 = vadd.f32 %v1912, %v1968
  %1970 = vmatmul.f32.gmra.mxu0 %v1928
  %v1971 = vpop.f32.mrf.mxu0
  %v1972 = vadd.f32 %v1912, %v1971
  %1973 = vmatmul.f32.gmra.mxu0 %v1931
  %v1974 = vpop.f32.mrf.mxu0
  %v1975 = vadd.f32 %v1912, %v1974
  %1976 = vmatmul.f32.gmra.mxu0 %v1934
  %v1977 = vpop.f32.mrf.mxu0
  %v1978 = vadd.f32 %v1912, %v1977
  %1979 = vmatmul.f32.gmra.mxu0 %v1937
  %v1980 = vpop.f32.mrf.mxu0
  %v1981 = vadd.f32 %v1912, %v1980
  %1982 = vdwg.mxu0
  %vm1983 = vcmask 80896
  %v1984 = vsel %vm1983, %v1960, -inf
  %1985 = vmax.xlane.f32.xlu0 %v1984
  %v1986 = vpop.xlane.xlu0 %1985
  %v1987 = vsel %vm1983, %v1963, -inf
  %1988 = vmax.xlane.f32.xlu0 %v1987
  %v1989 = vpop.xlane.xlu0 %1988
  %v1990 = vsel %vm1983, %v1966, -inf
  %1991 = vmax.xlane.f32.xlu0 %v1990
  %v1992 = vpop.xlane.xlu0 %1991
  %v1993 = vsel %vm1983, %v1969, -inf
  %1994 = vmax.xlane.f32.xlu0 %v1993
  %v1995 = vpop.xlane.xlu0 %1994
  %v1996 = vsel %vm1983, %v1972, -inf
  %1997 = vmax.xlane.f32.xlu0 %v1996
  %v1998 = vpop.xlane.xlu0 %1997
  %v1999 = vsel %vm1983, %v1975, -inf
  %2000 = vmax.xlane.f32.xlu0 %v1999
  %v2001 = vpop.xlane.xlu0 %2000
  %v2002 = vsel %vm1983, %v1978, -inf
  %2003 = vmax.xlane.f32.xlu0 %v2002
  %v2004 = vpop.xlane.xlu0 %2003
  %v2005 = vsel %vm1983, %v1981, -inf
  %2006 = vmax.xlane.f32.xlu0 %v2005
  %v2007 = vpop.xlane.xlu0 %2006
  %v2008 = vsub.f32 %v1960, %v1986
  %v2009 = vsub.f32 %v1963, %v1989
  %v2010 = vsub.f32 %v1966, %v1992
  %v2011 = vsub.f32 %v1969, %v1995
  %v2012 = vsub.f32 %v1972, %v1998
  %v2013 = vsub.f32 %v1975, %v2001
  %v2014 = vsub.f32 %v1978, %v2004
  %v2015 = vsub.f32 %v1981, %v2007
  %v2016 = vmul.f32 %v2008, 1.442695
  %v2017 = vpow.pop %v2016
  %v2018 = vmul.f32 %v2009, 1.442695
  %v2019 = vpow.pop %v2018
  %v2020 = vmul.f32 %v2010, 1.442695
  %v2021 = vpow.pop %v2020
  %v2022 = vmul.f32 %v2011, 1.442695
  %v2023 = vpow.pop %v2022
  %v2024 = vmul.f32 %v2012, 1.442695
  %v2025 = vpow.pop %v2024
  %v2026 = vmul.f32 %v2013, 1.442695
  %v2027 = vpow.pop %v2026
  %v2028 = vmul.f32 %v2014, 1.442695
  %v2029 = vpow.pop %v2028
  %v2030 = vmul.f32 %v2015, 1.442695
  %v2031 = vpow.pop %v2030
  %v2032 = vsel %vm1983, %v2017, 0.0
  %2033 = vadd.xlane.f32.xlu0 %v2032
  %v2034 = vpop.xlane.xlu0 %2033
  %v2035 = vsel %vm1983, %v2019, 0.0
  %2036 = vadd.xlane.f32.xlu0 %v2035
  %v2037 = vpop.xlane.xlu0 %2036
  %v2038 = vsel %vm1983, %v2021, 0.0
  %2039 = vadd.xlane.f32.xlu0 %v2038
  %v2040 = vpop.xlane.xlu0 %2039
  %v2041 = vsel %vm1983, %v2023, 0.0
  %2042 = vadd.xlane.f32.xlu0 %v2041
  %v2043 = vpop.xlane.xlu0 %2042
  %v2044 = vsel %vm1983, %v2025, 0.0
  %2045 = vadd.xlane.f32.xlu0 %v2044
  %v2046 = vpop.xlane.xlu0 %2045
  %v2047 = vsel %vm1983, %v2027, 0.0
  %2048 = vadd.xlane.f32.xlu0 %v2047
  %v2049 = vpop.xlane.xlu0 %2048
  %v2050 = vsel %vm1983, %v2029, 0.0
  %2051 = vadd.xlane.f32.xlu0 %v2050
  %v2052 = vpop.xlane.xlu0 %2051
  %v2053 = vsel %vm1983, %v2031, 0.0
  %2054 = vadd.xlane.f32.xlu0 %v2053
  %v2055 = vpop.xlane.xlu0 %2054
  %v2056 = vlog2.pop %v2034
  %v2057 = vmul.f32 %v2056, 0.6931472
  %v2058 = vlog2.pop %v2037
  %v2059 = vmul.f32 %v2058, 0.6931472
  %v2060 = vlog2.pop %v2040
  %v2061 = vmul.f32 %v2060, 0.6931472
  %v2062 = vlog2.pop %v2043
  %v2063 = vmul.f32 %v2062, 0.6931472
  %v2064 = vlog2.pop %v2046
  %v2065 = vmul.f32 %v2064, 0.6931472
  %v2066 = vlog2.pop %v2049
  %v2067 = vmul.f32 %v2066, 0.6931472
  %v2068 = vlog2.pop %v2052
  %v2069 = vmul.f32 %v2068, 0.6931472
  %v2070 = vlog2.pop %v2055
  %v2071 = vmul.f32 %v2070, 0.6931472
  %v2072 = vsub.f32 %v2008, %v2057
  %v2073 = vsub.f32 %v2009, %v2059
  %v2074 = vsub.f32 %v2010, %v2061
  %v2075 = vsub.f32 %v2011, %v2063
  %v2076 = vsub.f32 %v2012, %v2065
  %v2077 = vsub.f32 %v2013, %v2067
  %v2078 = vsub.f32 %v2014, %v2069
  %v2079 = vsub.f32 %v2015, %v2071
  %2080 = vst.msk [vmem:[%s12] sm:$0xff] %vm1983, %v2072
  %2081 = vst.msk [vmem:[%s12 + $0x8] sm:$0xff] %vm1983, %v2073
  %2082 = vst.msk [vmem:[%s12 + $0x10] sm:$0xff] %vm1983, %v2074
  %2083 = vst.msk [vmem:[%s12 + $0x18] sm:$0xff] %vm1983, %v2075
  %2084 = vst.msk [vmem:[%s12 + $0x20] sm:$0xff] %vm1983, %v2076
  %2085 = vst.msk [vmem:[%s12 + $0x28] sm:$0xff] %vm1983, %v2077
  %2086 = vst.msk [vmem:[%s12 + $0x30] sm:$0xff] %vm1983, %v2078
  %2087 = vst.msk [vmem:[%s12 + $0x38] sm:$0xff] %vm1983, %v2079
  // Predicated region
  $region50: #{convolutional_network_forward.1} parent=0 // pred_check
    _
  $region51: #{convolutional_network_forward.1} parent=0 // pred_check_branch
    %2089 = sbr.rel (0) target = $region53
  $region52: #{convolutional_network_forward.1} parent=0 // pred_region
    _
  $region53: #{convolutional_network_forward.1} parent=0 // pred_fallthru
    _
  // Predicated region
  $region54: #{convolutional_network_forward.1} parent=0 // pred_check
    _
  $region55: #{convolutional_network_forward.1} parent=0 // pred_check_branch
    %2091 = sbr.rel (0) target = $region57
  $region56: #{convolutional_network_forward.1} parent=0 // pred_region
    _
  $region57: #{convolutional_network_forward.1} parent=0 // pred_fallthru
    _

</llo_original>
